<compile_context>
chip_gen: v5e
topology: v5e:2x2
jax: 0.10.0
libtpu: 0.0.40
codegen_flags: <defaults>
</compile_context>

<pallas_src>
import math

import jax
import jax.numpy as jnp
from jax.experimental import pallas as pl
from jax.experimental.pallas import tpu as pltpu

# ---- small, module-consistent dimensions (scaled down from the defaults) ----
FEATURE_DIM = 8      # TRANSFOMER_OUT_FEATURES
CONTEXT_DIM = 16     # SHORT_CONTEXT
HIDDEN_DIM = 128     # RNN_HIDDEN_DIM
N_LAYERS = 3         # RNN_N_LAYERS
VOCAB_DIM = 512      # VOCAB_DIM
LN_EPS = 1e-5


def _normalize(v):
    """LayerNorm without affine (gamma/beta folded into the next matmul)."""
    mu = jnp.mean(v, axis=-1, keepdims=True)
    var = jnp.mean((v - mu) ** 2, axis=-1, keepdims=True)
    return (v - mu) * jax.lax.rsqrt(var + LN_EPS)


def _layernorm(v, gamma, beta):
    return _normalize(v) * gamma + beta


def _rnn_kernel(
    x_ref,          # [B, T*F]   bf16
    state_ref,      # [L, B, H]  f32
    w_in_ref,       # [T*F, H]   bf16
    w_mixu_ref,     # [L, 2H, H] bf16  (rows 0:H = gamma_prev-scaled w_mix, H:2H = u_mix)
    b_ds_ref,       # [L, 1, H]  f32   (beta_prev @ w_mix)
    g_mix_ref,      # [L, 1, H]  f32
    b_mix_ref,      # [L, 1, H]  f32
    w_out_ref,      # [L, H, H]  bf16
    w_dist_ref,     # [H, V]     bf16  (rows scaled by gamma_out[-1])
    b_dist_ref,     # [1, V]     f32   (beta_out[-1] @ w_dist + b_dist)
    dist_ref,       # out: [B, V]      f32
    state_out_ref,  # out: [L, B, H]   f32
):
    # to_hidden + in_norm (affine folded into w_mixu[0]).
    h = jnp.dot(x_ref[...], w_in_ref[...], preferred_element_type=jnp.float32)
    h = _normalize(h)

    n_layers = state_ref.shape[0]
    for l in range(n_layers):  # static unroll over layers
        s = state_ref[l]                                           # [B, H] f32
        # fused (w_mix | u_mix) matmul: K = 2H = 256 -> one MXU pass on v6e/v7x
        hs = jnp.concatenate([h, s], axis=-1).astype(jnp.bfloat16)  # [B, 2H]
        ds = jnp.dot(hs, w_mixu_ref[l], preferred_element_type=jnp.float32)
        ds = ds + b_ds_ref[l]
        s_new = _layernorm(s + ds, g_mix_ref[l], b_mix_ref[l])      # mix_norm (affine kept)
        state_out_ref[l] = s_new                                    # unmasked (8,128) store
        out = jnp.dot(s_new.astype(jnp.bfloat16), w_out_ref[l],
                      preferred_element_type=jnp.float32)
        h = _normalize(out)                                         # out_norm affine folded fwd

    # to_dist + softmax (out_norm[-1] affine folded into w_dist / b_dist).
    logits = jnp.dot(h.astype(jnp.bfloat16), w_dist_ref[...],
                     preferred_element_type=jnp.float32) + b_dist_ref[...]
    m = jnp.max(logits, axis=-1, keepdims=True)
    e = jnp.exp(logits - m)
    dist_ref[...] = e * pl.reciprocal(jnp.sum(e, axis=-1, keepdims=True), approx=True)


def fold_params(params):
    """Fold in_norm/out_norm affines into the following weights; cast matmul operands to bf16."""
    # Affine that feeds layer l's w_mix: in_norm for l=0, out_norm[l-1] otherwise.
    g_prev = jnp.concatenate([params["g_in"][None], params["g_out"][:-1]], axis=0)  # [L,1,H]
    b_prev = jnp.concatenate([params["b_in"][None], params["b_out"][:-1]], axis=0)  # [L,1,H]
    w_mix_scaled = params["w_mix"] * jnp.swapaxes(g_prev, 1, 2)          # scale rows: [L,H,H]
    w_mixu = jnp.concatenate([w_mix_scaled, params["u_mix"]], axis=1)    # [L,2H,H]
    b_ds = jnp.matmul(b_prev, params["w_mix"])                           # [L,1,H]

    g_last = params["g_out"][-1]                                         # [1,H]
    b_last = params["b_out"][-1]                                         # [1,H]
    w_dist_f = params["w_dist"] * g_last.T                               # [H,V]
    b_dist_f = params["b_dist"] + b_last @ params["w_dist"]              # [1,V]

    return {
        "w_in": params["w_in"].astype(jnp.bfloat16),
        "w_mixu": w_mixu.astype(jnp.bfloat16),
        "b_ds": b_ds.astype(jnp.float32),
        "g_mix": params["g_mix"].astype(jnp.float32),
        "b_mix": params["b_mix"].astype(jnp.float32),
        "w_out": params["w_out"].astype(jnp.bfloat16),
        "w_dist": w_dist_f.astype(jnp.bfloat16),
        "b_dist": b_dist_f.astype(jnp.float32),
    }


def long_context_rnn_forward(x, state, fparams):
    """x: [*B, T, F]  state: [*B, L, H]  ->  (dist [*B, V], new_state [*B, L, H])."""
    *batch, T, Fd = x.shape
    L, H = state.shape[-2], state.shape[-1]
    V = fparams["w_dist"].shape[-1]
    B = math.prod(batch) if batch else 1

    x_flat = x.reshape(B, T * Fd).astype(jnp.float32)
    # [L, B, H] layout: each per-layer slice is a full (8,128) tile.
    state_lbh = jnp.transpose(state.reshape(B, L, H).astype(jnp.float32), (1, 0, 2))

    # Pad batch rows to a multiple of 8 (full sublane tiles; padded rows are discarded).
    Bp = ((B + 7) // 8) * 8
    if Bp != B:
        x_flat = jnp.pad(x_flat, ((0, Bp - B), (0, 0)))
        state_lbh = jnp.pad(state_lbh, ((0, 0), (0, Bp - B), (0, 0)))
    x_bf16 = x_flat.astype(jnp.bfloat16)

    vmem = pl.BlockSpec(memory_space=pltpu.MemorySpace.VMEM)
    n_inputs = 10

    dist, new_state = pl.pallas_call(
        _rnn_kernel,
        out_shape=(
            jax.ShapeDtypeStruct((Bp, V), jnp.float32),
            jax.ShapeDtypeStruct((L, Bp, H), jnp.float32),
        ),
        in_specs=[vmem] * n_inputs,
        out_specs=(vmem, vmem),
    )(
        x_bf16,
        state_lbh,
        fparams["w_in"],
        fparams["w_mixu"],
        fparams["b_ds"],
        fparams["g_mix"],
        fparams["b_mix"],
        fparams["w_out"],
        fparams["w_dist"],
        fparams["b_dist"],
    )

    dist = dist[:B].reshape(*batch, V)
    new_state = jnp.transpose(new_state[:, :B, :], (1, 0, 2)).reshape(*batch, L, H)
    return dist, new_state


def reference_forward(x, state, params):
    """Pure-JAX f32 reference mirroring the PyTorch module (unfolded params)."""
    *batch, T, Fd = x.shape
    L, H = state.shape[-2], state.shape[-1]
    B = math.prod(batch) if batch else 1
    xf = x.reshape(B, T * Fd)
    st = state.reshape(B, L, H)

    hidden = xf @ params["w_in"]
    hidden = _layernorm(hidden, params["g_in"], params["b_in"])
    new_state = []
    for l in range(L):
        s = st[:, l, :]
        ds = hidden @ params["w_mix"][l] + s @ params["u_mix"][l]
        s_new = _layernorm(s + ds, params["g_mix"][l], params["b_mix"][l])
        out = s_new @ params["w_out"][l]
        hidden = _layernorm(out, params["g_out"][l], params["b_out"][l])
        new_state.append(s_new)
    logits = hidden @ params["w_dist"] + params["b_dist"]
    dist = jax.nn.softmax(logits, axis=-1)
    new_state = jnp.stack(new_state, axis=1)
    V = params["w_dist"].shape[-1]
    return dist.reshape(*batch, V), new_state.reshape(*batch, L, H)


def make_params(key, feature_dim, context_dim, hidden_dim, n_layers, vocab_dim):
    ks = jax.random.split(key, 12)
    tf = feature_dim * context_dim
    scale_in = 1.0 / jnp.sqrt(tf)
    scale_h = 1.0 / jnp.sqrt(hidden_dim)

    def gamma(k, shape):
        return 1.0 + 0.1 * jax.random.normal(k, shape, jnp.float32)

    def beta(k, shape):
        return 0.05 * jax.random.normal(k, shape, jnp.float32)

    return {
        # Linear weights stored as [in, out] (transposed from PyTorch's [out, in]).
        "w_in": jax.random.normal(ks[0], (tf, hidden_dim), jnp.float32) * scale_in,
        "g_in": gamma(ks[5], (1, hidden_dim)),
        "b_in": beta(ks[6], (1, hidden_dim)),
        "w_mix": jax.random.normal(ks[1], (n_layers, hidden_dim, hidden_dim), jnp.float32) * scale_h,
        "u_mix": jax.random.normal(ks[2], (n_layers, hidden_dim, hidden_dim), jnp.float32) * scale_h,
        "g_mix": gamma(ks[7], (n_layers, 1, hidden_dim)),
        "b_mix": beta(ks[8], (n_layers, 1, hidden_dim)),
        "w_out": jax.random.normal(ks[3], (n_layers, hidden_dim, hidden_dim), jnp.float32) * scale_h,
        "g_out": gamma(ks[9], (n_layers, 1, hidden_dim)),
        "b_out": beta(ks[10], (n_layers, 1, hidden_dim)),
        "w_dist": jax.random.normal(ks[4], (hidden_dim, vocab_dim), jnp.float32) * scale_h,
        "b_dist": jax.random.normal(ks[11], (1, vocab_dim), jnp.float32) * 0.01,
    }


if __name__ == "__main__":
    key = jax.random.PRNGKey(0)
    kx, ks, kp = jax.random.split(key, 3)

    # Two batch dims, matching the module's `state[:, :, id, :]` indexing
    # (state is [*B, L, H] with *B = (B1, B2)).
    B1, B2 = 2, 4
    x = jax.random.normal(kx, (B1, B2, CONTEXT_DIM, FEATURE_DIM), jnp.float32)
    state = jax.random.normal(ks, (B1, B2, N_LAYERS, HIDDEN_DIM), jnp.float32)
    params = make_params(kp, FEATURE_DIM, CONTEXT_DIM, HIDDEN_DIM, N_LAYERS, VOCAB_DIM)

    # One-time weight prep (fold LN affines, fuse w_mix|u_mix, cast to bf16).
    fparams = jax.tree_util.tree_map(jax.device_put, fold_params(params))

    dist, new_state = long_context_rnn_forward(x, state, fparams)
    jax.block_until_ready((dist, new_state))

    dist_ref, state_ref = reference_forward(x, state, params)
    assert dist.shape == (B1, B2, VOCAB_DIM)
    assert new_state.shape == (B1, B2, N_LAYERS, HIDDEN_DIM)
    # bf16 matmul operands + approx reciprocal -> loosened tolerances vs the f32 reference.
    assert jnp.allclose(dist, dist_ref, atol=5e-4, rtol=5e-2)
    assert jnp.allclose(new_state, state_ref, atol=3e-2, rtol=3e-2)
    assert jnp.allclose(jnp.sum(dist, axis=-1), 1.0, atol=5e-3)

    print("KERNEL_OK")
</pallas_src>

<mosaic_0001>
module attributes {stable_mosaic.version = 11 : i64} {
  func.func @_rnn_kernel(%arg0: memref<8x128xbf16, #tpu.memory_space<vmem>>, %arg1: memref<3x8x128xf32, #tpu.memory_space<vmem>>, %arg2: memref<128x128xbf16, #tpu.memory_space<vmem>>, %arg3: memref<3x256x128xbf16, #tpu.memory_space<vmem>>, %arg4: memref<3x1x128xf32, #tpu.memory_space<vmem>>, %arg5: memref<3x1x128xf32, #tpu.memory_space<vmem>>, %arg6: memref<3x1x128xf32, #tpu.memory_space<vmem>>, %arg7: memref<3x128x128xbf16, #tpu.memory_space<vmem>>, %arg8: memref<128x512xbf16, #tpu.memory_space<vmem>>, %arg9: memref<1x512xf32, #tpu.memory_space<vmem>>, %arg10: memref<8x512xf32, #tpu.memory_space<vmem>>, %arg11: memref<3x8x128xf32, #tpu.memory_space<vmem>>) attributes {dimension_semantics = [], scalar_prefetch = 0 : i64, scratch_operands = 0 : i64, tpu.core_type = #tpu.core_type<tc>} {
    %c0 = arith.constant 0 : index
    %c0_0 = arith.constant 0 : index
    %0 = vector.load %arg0[%c0, %c0_0] : memref<8x128xbf16, #tpu.memory_space<vmem>>, vector<8x128xbf16>
    %c0_1 = arith.constant 0 : index
    %c0_2 = arith.constant 0 : index
    %1 = vector.load %arg2[%c0_1, %c0_2] : memref<128x128xbf16, #tpu.memory_space<vmem>>, vector<128x128xbf16>
    %cst = arith.constant dense<0.000000e+00> : vector<8x128xf32>
    %2 = tpu.matmul %0, %1, %cst {dimension_numbers = #tpu.dot_dimension_numbers<[1], [0], [0], [1], [0, 0, 1, 1], [], []>} : vector<8x128xbf16>, vector<128x128xbf16>, vector<8x128xf32> -> vector<8x128xf32>
    %cst_3 = arith.constant dense<0.000000e+00> : vector<8xf32>
    %3 = vector.multi_reduction <add>, %2, %cst_3 [1] : vector<8x128xf32> to vector<8xf32>
    %4 = vector.shape_cast %3 : vector<8xf32> to vector<8x1xf32>
    %cst_4 = arith.constant 1.280000e+02 : f32
    %5 = vector.broadcast %cst_4 : f32 to vector<8x1xf32>
    %6 = arith.divf %4, %5 : vector<8x1xf32>
    %7 = vector.broadcast %6 : vector<8x1xf32> to vector<8x128xf32>
    %8 = arith.subf %2, %7 : vector<8x128xf32>
    %9 = arith.mulf %8, %8 : vector<8x128xf32>
    %cst_5 = arith.constant dense<0.000000e+00> : vector<8xf32>
    %10 = vector.multi_reduction <add>, %9, %cst_5 [1] : vector<8x128xf32> to vector<8xf32>
    %11 = vector.shape_cast %10 : vector<8xf32> to vector<8x1xf32>
    %cst_6 = arith.constant 1.280000e+02 : f32
    %12 = vector.broadcast %cst_6 : f32 to vector<8x1xf32>
    %13 = arith.divf %11, %12 : vector<8x1xf32>
    %14 = vector.broadcast %6 : vector<8x1xf32> to vector<8x128xf32>
    %15 = arith.subf %2, %14 : vector<8x128xf32>
    %cst_7 = arith.constant 9.99999974E-6 : f32
    %16 = vector.broadcast %cst_7 : f32 to vector<8x1xf32>
    %17 = arith.addf %13, %16 : vector<8x1xf32>
    %18 = math.rsqrt %17 : vector<8x1xf32>
    %19 = vector.broadcast %18 : vector<8x1xf32> to vector<8x128xf32>
    %20 = arith.mulf %15, %19 : vector<8x128xf32>
    %c0_8 = arith.constant 0 : index
    %c0_9 = arith.constant 0 : index
    %c0_10 = arith.constant 0 : index
    %21 = vector.load %arg1[%c0_8, %c0_9, %c0_10] : memref<3x8x128xf32, #tpu.memory_space<vmem>>, vector<1x8x128xf32>
    %22 = vector.shape_cast %21 : vector<1x8x128xf32> to vector<8x128xf32>
    %23 = tpu.concatenate %20, %22 in 1 : vector<8x128xf32>, vector<8x128xf32> -> vector<8x256xf32>
    %24 = arith.truncf %23 : vector<8x256xf32> to vector<8x256xbf16>
    %c0_11 = arith.constant 0 : index
    %c0_12 = arith.constant 0 : index
    %c0_13 = arith.constant 0 : index
    %25 = vector.load %arg3[%c0_11, %c0_12, %c0_13] : memref<3x256x128xbf16, #tpu.memory_space<vmem>>, vector<1x256x128xbf16>
    %26 = vector.shape_cast %25 : vector<1x256x128xbf16> to vector<256x128xbf16>
    %cst_14 = arith.constant dense<0.000000e+00> : vector<8x128xf32>
    %27 = tpu.matmul %24, %26, %cst_14 {dimension_numbers = #tpu.dot_dimension_numbers<[1], [0], [0], [1], [0, 0, 1, 1], [], []>} : vector<8x256xbf16>, vector<256x128xbf16>, vector<8x128xf32> -> vector<8x128xf32>
    %c0_15 = arith.constant 0 : index
    %c0_16 = arith.constant 0 : index
    %c0_17 = arith.constant 0 : index
    %28 = vector.load %arg4[%c0_15, %c0_16, %c0_17] : memref<3x1x128xf32, #tpu.memory_space<vmem>>, vector<1x1x128xf32>
    %29 = vector.shape_cast %28 : vector<1x1x128xf32> to vector<1x128xf32>
    %30 = vector.broadcast %29 : vector<1x128xf32> to vector<8x128xf32>
    %31 = arith.addf %27, %30 : vector<8x128xf32>
    %32 = arith.addf %22, %31 : vector<8x128xf32>
    %c0_18 = arith.constant 0 : index
    %c0_19 = arith.constant 0 : index
    %c0_20 = arith.constant 0 : index
    %33 = vector.load %arg5[%c0_18, %c0_19, %c0_20] : memref<3x1x128xf32, #tpu.memory_space<vmem>>, vector<1x1x128xf32>
    %34 = vector.shape_cast %33 : vector<1x1x128xf32> to vector<1x128xf32>
    %c0_21 = arith.constant 0 : index
    %c0_22 = arith.constant 0 : index
    %c0_23 = arith.constant 0 : index
    %35 = vector.load %arg6[%c0_21, %c0_22, %c0_23] : memref<3x1x128xf32, #tpu.memory_space<vmem>>, vector<1x1x128xf32>
    %36 = vector.shape_cast %35 : vector<1x1x128xf32> to vector<1x128xf32>
    %cst_24 = arith.constant dense<0.000000e+00> : vector<8xf32>
    %37 = vector.multi_reduction <add>, %32, %cst_24 [1] : vector<8x128xf32> to vector<8xf32>
    %38 = vector.shape_cast %37 : vector<8xf32> to vector<8x1xf32>
    %cst_25 = arith.constant 1.280000e+02 : f32
    %39 = vector.broadcast %cst_25 : f32 to vector<8x1xf32>
    %40 = arith.divf %38, %39 : vector<8x1xf32>
    %41 = vector.broadcast %40 : vector<8x1xf32> to vector<8x128xf32>
    %42 = arith.subf %32, %41 : vector<8x128xf32>
    %43 = arith.mulf %42, %42 : vector<8x128xf32>
    %cst_26 = arith.constant dense<0.000000e+00> : vector<8xf32>
    %44 = vector.multi_reduction <add>, %43, %cst_26 [1] : vector<8x128xf32> to vector<8xf32>
    %45 = vector.shape_cast %44 : vector<8xf32> to vector<8x1xf32>
    %cst_27 = arith.constant 1.280000e+02 : f32
    %46 = vector.broadcast %cst_27 : f32 to vector<8x1xf32>
    %47 = arith.divf %45, %46 : vector<8x1xf32>
    %48 = vector.broadcast %40 : vector<8x1xf32> to vector<8x128xf32>
    %49 = arith.subf %32, %48 : vector<8x128xf32>
    %cst_28 = arith.constant 9.99999974E-6 : f32
    %50 = vector.broadcast %cst_28 : f32 to vector<8x1xf32>
    %51 = arith.addf %47, %50 : vector<8x1xf32>
    %52 = math.rsqrt %51 : vector<8x1xf32>
    %53 = vector.broadcast %52 : vector<8x1xf32> to vector<8x128xf32>
    %54 = arith.mulf %49, %53 : vector<8x128xf32>
    %55 = vector.broadcast %34 : vector<1x128xf32> to vector<8x128xf32>
    %56 = arith.mulf %54, %55 : vector<8x128xf32>
    %57 = vector.broadcast %36 : vector<1x128xf32> to vector<8x128xf32>
    %58 = arith.addf %56, %57 : vector<8x128xf32>
    %c0_29 = arith.constant 0 : index
    %c0_30 = arith.constant 0 : index
    %c0_31 = arith.constant 0 : index
    %59 = vector.load %arg11[%c0_29, %c0_30, %c0_31] : memref<3x8x128xf32, #tpu.memory_space<vmem>>, vector<1x8x128xf32>
    %60 = vector.shape_cast %59 : vector<1x8x128xf32> to vector<8x128xf32>
    %61 = vector.shape_cast %58 : vector<8x128xf32> to vector<1x8x128xf32>
    tpu.vector_store %arg11[%c0_29, %c0_30, %c0_31], %61 {strides = array<i32>} : memref<3x8x128xf32, #tpu.memory_space<vmem>>, vector<1x8x128xf32>,
    %62 = arith.truncf %58 : vector<8x128xf32> to vector<8x128xbf16>
    %c0_32 = arith.constant 0 : index
    %c0_33 = arith.constant 0 : index
    %c0_34 = arith.constant 0 : index
    %63 = vector.load %arg7[%c0_32, %c0_33, %c0_34] : memref<3x128x128xbf16, #tpu.memory_space<vmem>>, vector<1x128x128xbf16>
    %64 = vector.shape_cast %63 : vector<1x128x128xbf16> to vector<128x128xbf16>
    %cst_35 = arith.constant dense<0.000000e+00> : vector<8x128xf32>
    %65 = tpu.matmul %62, %64, %cst_35 {dimension_numbers = #tpu.dot_dimension_numbers<[1], [0], [0], [1], [0, 0, 1, 1], [], []>} : vector<8x128xbf16>, vector<128x128xbf16>, vector<8x128xf32> -> vector<8x128xf32>
    %cst_36 = arith.constant dense<0.000000e+00> : vector<8xf32>
    %66 = vector.multi_reduction <add>, %65, %cst_36 [1] : vector<8x128xf32> to vector<8xf32>
    %67 = vector.shape_cast %66 : vector<8xf32> to vector<8x1xf32>
    %cst_37 = arith.constant 1.280000e+02 : f32
    %68 = vector.broadcast %cst_37 : f32 to vector<8x1xf32>
    %69 = arith.divf %67, %68 : vector<8x1xf32>
    %70 = vector.broadcast %69 : vector<8x1xf32> to vector<8x128xf32>
    %71 = arith.subf %65, %70 : vector<8x128xf32>
    %72 = arith.mulf %71, %71 : vector<8x128xf32>
    %cst_38 = arith.constant dense<0.000000e+00> : vector<8xf32>
    %73 = vector.multi_reduction <add>, %72, %cst_38 [1] : vector<8x128xf32> to vector<8xf32>
    %74 = vector.shape_cast %73 : vector<8xf32> to vector<8x1xf32>
    %cst_39 = arith.constant 1.280000e+02 : f32
    %75 = vector.broadcast %cst_39 : f32 to vector<8x1xf32>
    %76 = arith.divf %74, %75 : vector<8x1xf32>
    %77 = vector.broadcast %69 : vector<8x1xf32> to vector<8x128xf32>
    %78 = arith.subf %65, %77 : vector<8x128xf32>
    %cst_40 = arith.constant 9.99999974E-6 : f32
    %79 = vector.broadcast %cst_40 : f32 to vector<8x1xf32>
    %80 = arith.addf %76, %79 : vector<8x1xf32>
    %81 = math.rsqrt %80 : vector<8x1xf32>
    %82 = vector.broadcast %81 : vector<8x1xf32> to vector<8x128xf32>
    %83 = arith.mulf %78, %82 : vector<8x128xf32>
    %c1 = arith.constant 1 : index
    %c0_41 = arith.constant 0 : index
    %c0_42 = arith.constant 0 : index
    %84 = vector.load %arg1[%c1, %c0_41, %c0_42] : memref<3x8x128xf32, #tpu.memory_space<vmem>>, vector<1x8x128xf32>
    %85 = vector.shape_cast %84 : vector<1x8x128xf32> to vector<8x128xf32>
    %86 = tpu.concatenate %83, %85 in 1 : vector<8x128xf32>, vector<8x128xf32> -> vector<8x256xf32>
    %87 = arith.truncf %86 : vector<8x256xf32> to vector<8x256xbf16>
    %c1_43 = arith.constant 1 : index
    %c0_44 = arith.constant 0 : index
    %c0_45 = arith.constant 0 : index
    %88 = vector.load %arg3[%c1_43, %c0_44, %c0_45] : memref<3x256x128xbf16, #tpu.memory_space<vmem>>, vector<1x256x128xbf16>
    %89 = vector.shape_cast %88 : vector<1x256x128xbf16> to vector<256x128xbf16>
    %cst_46 = arith.constant dense<0.000000e+00> : vector<8x128xf32>
    %90 = tpu.matmul %87, %89, %cst_46 {dimension_numbers = #tpu.dot_dimension_numbers<[1], [0], [0], [1], [0, 0, 1, 1], [], []>} : vector<8x256xbf16>, vector<256x128xbf16>, vector<8x128xf32> -> vector<8x128xf32>
    %c1_47 = arith.constant 1 : index
    %c0_48 = arith.constant 0 : index
    %c0_49 = arith.constant 0 : index
    %91 = vector.load %arg4[%c1_47, %c0_48, %c0_49] : memref<3x1x128xf32, #tpu.memory_space<vmem>>, vector<1x1x128xf32>
    %92 = vector.shape_cast %91 : vector<1x1x128xf32> to vector<1x128xf32>
    %93 = vector.broadcast %92 : vector<1x128xf32> to vector<8x128xf32>
    %94 = arith.addf %90, %93 : vector<8x128xf32>
    %95 = arith.addf %85, %94 : vector<8x128xf32>
    %c1_50 = arith.constant 1 : index
    %c0_51 = arith.constant 0 : index
    %c0_52 = arith.constant 0 : index
    %96 = vector.load %arg5[%c1_50, %c0_51, %c0_52] : memref<3x1x128xf32, #tpu.memory_space<vmem>>, vector<1x1x128xf32>
    %97 = vector.shape_cast %96 : vector<1x1x128xf32> to vector<1x128xf32>
    %c1_53 = arith.constant 1 : index
    %c0_54 = arith.constant 0 : index
    %c0_55 = arith.constant 0 : index
    %98 = vector.load %arg6[%c1_53, %c0_54, %c0_55] : memref<3x1x128xf32, #tpu.memory_space<vmem>>, vector<1x1x128xf32>
    %99 = vector.shape_cast %98 : vector<1x1x128xf32> to vector<1x128xf32>
    %cst_56 = arith.constant dense<0.000000e+00> : vector<8xf32>
    %100 = vector.multi_reduction <add>, %95, %cst_56 [1] : vector<8x128xf32> to vector<8xf32>
    %101 = vector.shape_cast %100 : vector<8xf32> to vector<8x1xf32>
    %cst_57 = arith.constant 1.280000e+02 : f32
    %102 = vector.broadcast %cst_57 : f32 to vector<8x1xf32>
    %103 = arith.divf %101, %102 : vector<8x1xf32>
    %104 = vector.broadcast %103 : vector<8x1xf32> to vector<8x128xf32>
    %105 = arith.subf %95, %104 : vector<8x128xf32>
    %106 = arith.mulf %105, %105 : vector<8x128xf32>
    %cst_58 = arith.constant dense<0.000000e+00> : vector<8xf32>
    %107 = vector.multi_reduction <add>, %106, %cst_58 [1] : vector<8x128xf32> to vector<8xf32>
    %108 = vector.shape_cast %107 : vector<8xf32> to vector<8x1xf32>
    %cst_59 = arith.constant 1.280000e+02 : f32
    %109 = vector.broadcast %cst_59 : f32 to vector<8x1xf32>
    %110 = arith.divf %108, %109 : vector<8x1xf32>
    %111 = vector.broadcast %103 : vector<8x1xf32> to vector<8x128xf32>
    %112 = arith.subf %95, %111 : vector<8x128xf32>
    %cst_60 = arith.constant 9.99999974E-6 : f32
    %113 = vector.broadcast %cst_60 : f32 to vector<8x1xf32>
    %114 = arith.addf %110, %113 : vector<8x1xf32>
    %115 = math.rsqrt %114 : vector<8x1xf32>
    %116 = vector.broadcast %115 : vector<8x1xf32> to vector<8x128xf32>
    %117 = arith.mulf %112, %116 : vector<8x128xf32>
    %118 = vector.broadcast %97 : vector<1x128xf32> to vector<8x128xf32>
    %119 = arith.mulf %117, %118 : vector<8x128xf32>
    %120 = vector.broadcast %99 : vector<1x128xf32> to vector<8x128xf32>
    %121 = arith.addf %119, %120 : vector<8x128xf32>
    %c1_61 = arith.constant 1 : index
    %c0_62 = arith.constant 0 : index
    %c0_63 = arith.constant 0 : index
    %122 = vector.load %arg11[%c1_61, %c0_62, %c0_63] : memref<3x8x128xf32, #tpu.memory_space<vmem>>, vector<1x8x128xf32>
    %123 = vector.shape_cast %122 : vector<1x8x128xf32> to vector<8x128xf32>
    %124 = vector.shape_cast %121 : vector<8x128xf32> to vector<1x8x128xf32>
    tpu.vector_store %arg11[%c1_61, %c0_62, %c0_63], %124 {strides = array<i32>} : memref<3x8x128xf32, #tpu.memory_space<vmem>>, vector<1x8x128xf32>,
    %125 = arith.truncf %121 : vector<8x128xf32> to vector<8x128xbf16>
    %c1_64 = arith.constant 1 : index
    %c0_65 = arith.constant 0 : index
    %c0_66 = arith.constant 0 : index
    %126 = vector.load %arg7[%c1_64, %c0_65, %c0_66] : memref<3x128x128xbf16, #tpu.memory_space<vmem>>, vector<1x128x128xbf16>
    %127 = vector.shape_cast %126 : vector<1x128x128xbf16> to vector<128x128xbf16>
    %cst_67 = arith.constant dense<0.000000e+00> : vector<8x128xf32>
    %128 = tpu.matmul %125, %127, %cst_67 {dimension_numbers = #tpu.dot_dimension_numbers<[1], [0], [0], [1], [0, 0, 1, 1], [], []>} : vector<8x128xbf16>, vector<128x128xbf16>, vector<8x128xf32> -> vector<8x128xf32>
    %cst_68 = arith.constant dense<0.000000e+00> : vector<8xf32>
    %129 = vector.multi_reduction <add>, %128, %cst_68 [1] : vector<8x128xf32> to vector<8xf32>
    %130 = vector.shape_cast %129 : vector<8xf32> to vector<8x1xf32>
    %cst_69 = arith.constant 1.280000e+02 : f32
    %131 = vector.broadcast %cst_69 : f32 to vector<8x1xf32>
    %132 = arith.divf %130, %131 : vector<8x1xf32>
    %133 = vector.broadcast %132 : vector<8x1xf32> to vector<8x128xf32>
    %134 = arith.subf %128, %133 : vector<8x128xf32>
    %135 = arith.mulf %134, %134 : vector<8x128xf32>
    %cst_70 = arith.constant dense<0.000000e+00> : vector<8xf32>
    %136 = vector.multi_reduction <add>, %135, %cst_70 [1] : vector<8x128xf32> to vector<8xf32>
    %137 = vector.shape_cast %136 : vector<8xf32> to vector<8x1xf32>
    %cst_71 = arith.constant 1.280000e+02 : f32
    %138 = vector.broadcast %cst_71 : f32 to vector<8x1xf32>
    %139 = arith.divf %137, %138 : vector<8x1xf32>
    %140 = vector.broadcast %132 : vector<8x1xf32> to vector<8x128xf32>
    %141 = arith.subf %128, %140 : vector<8x128xf32>
    %cst_72 = arith.constant 9.99999974E-6 : f32
    %142 = vector.broadcast %cst_72 : f32 to vector<8x1xf32>
    %143 = arith.addf %139, %142 : vector<8x1xf32>
    %144 = math.rsqrt %143 : vector<8x1xf32>
    %145 = vector.broadcast %144 : vector<8x1xf32> to vector<8x128xf32>
    %146 = arith.mulf %141, %145 : vector<8x128xf32>
    %c2 = arith.constant 2 : index
    %c0_73 = arith.constant 0 : index
    %c0_74 = arith.constant 0 : index
    %147 = vector.load %arg1[%c2, %c0_73, %c0_74] : memref<3x8x128xf32, #tpu.memory_space<vmem>>, vector<1x8x128xf32>
    %148 = vector.shape_cast %147 : vector<1x8x128xf32> to vector<8x128xf32>
    %149 = tpu.concatenate %146, %148 in 1 : vector<8x128xf32>, vector<8x128xf32> -> vector<8x256xf32>
    %150 = arith.truncf %149 : vector<8x256xf32> to vector<8x256xbf16>
    %c2_75 = arith.constant 2 : index
    %c0_76 = arith.constant 0 : index
    %c0_77 = arith.constant 0 : index
    %151 = vector.load %arg3[%c2_75, %c0_76, %c0_77] : memref<3x256x128xbf16, #tpu.memory_space<vmem>>, vector<1x256x128xbf16>
    %152 = vector.shape_cast %151 : vector<1x256x128xbf16> to vector<256x128xbf16>
    %cst_78 = arith.constant dense<0.000000e+00> : vector<8x128xf32>
    %153 = tpu.matmul %150, %152, %cst_78 {dimension_numbers = #tpu.dot_dimension_numbers<[1], [0], [0], [1], [0, 0, 1, 1], [], []>} : vector<8x256xbf16>, vector<256x128xbf16>, vector<8x128xf32> -> vector<8x128xf32>
    %c2_79 = arith.constant 2 : index
    %c0_80 = arith.constant 0 : index
    %c0_81 = arith.constant 0 : index
    %154 = vector.load %arg4[%c2_79, %c0_80, %c0_81] : memref<3x1x128xf32, #tpu.memory_space<vmem>>, vector<1x1x128xf32>
    %155 = vector.shape_cast %154 : vector<1x1x128xf32> to vector<1x128xf32>
    %156 = vector.broadcast %155 : vector<1x128xf32> to vector<8x128xf32>
    %157 = arith.addf %153, %156 : vector<8x128xf32>
    %158 = arith.addf %148, %157 : vector<8x128xf32>
    %c2_82 = arith.constant 2 : index
    %c0_83 = arith.constant 0 : index
    %c0_84 = arith.constant 0 : index
    %159 = vector.load %arg5[%c2_82, %c0_83, %c0_84] : memref<3x1x128xf32, #tpu.memory_space<vmem>>, vector<1x1x128xf32>
    %160 = vector.shape_cast %159 : vector<1x1x128xf32> to vector<1x128xf32>
    %c2_85 = arith.constant 2 : index
    %c0_86 = arith.constant 0 : index
    %c0_87 = arith.constant 0 : index
    %161 = vector.load %arg6[%c2_85, %c0_86, %c0_87] : memref<3x1x128xf32, #tpu.memory_space<vmem>>, vector<1x1x128xf32>
    %162 = vector.shape_cast %161 : vector<1x1x128xf32> to vector<1x128xf32>
    %cst_88 = arith.constant dense<0.000000e+00> : vector<8xf32>
    %163 = vector.multi_reduction <add>, %158, %cst_88 [1] : vector<8x128xf32> to vector<8xf32>
    %164 = vector.shape_cast %163 : vector<8xf32> to vector<8x1xf32>
    %cst_89 = arith.constant 1.280000e+02 : f32
    %165 = vector.broadcast %cst_89 : f32 to vector<8x1xf32>
    %166 = arith.divf %164, %165 : vector<8x1xf32>
    %167 = vector.broadcast %166 : vector<8x1xf32> to vector<8x128xf32>
    %168 = arith.subf %158, %167 : vector<8x128xf32>
    %169 = arith.mulf %168, %168 : vector<8x128xf32>
    %cst_90 = arith.constant dense<0.000000e+00> : vector<8xf32>
    %170 = vector.multi_reduction <add>, %169, %cst_90 [1] : vector<8x128xf32> to vector<8xf32>
    %171 = vector.shape_cast %170 : vector<8xf32> to vector<8x1xf32>
    %cst_91 = arith.constant 1.280000e+02 : f32
    %172 = vector.broadcast %cst_91 : f32 to vector<8x1xf32>
    %173 = arith.divf %171, %172 : vector<8x1xf32>
    %174 = vector.broadcast %166 : vector<8x1xf32> to vector<8x128xf32>
    %175 = arith.subf %158, %174 : vector<8x128xf32>
    %cst_92 = arith.constant 9.99999974E-6 : f32
    %176 = vector.broadcast %cst_92 : f32 to vector<8x1xf32>
    %177 = arith.addf %173, %176 : vector<8x1xf32>
    %178 = math.rsqrt %177 : vector<8x1xf32>
    %179 = vector.broadcast %178 : vector<8x1xf32> to vector<8x128xf32>
    %180 = arith.mulf %175, %179 : vector<8x128xf32>
    %181 = vector.broadcast %160 : vector<1x128xf32> to vector<8x128xf32>
    %182 = arith.mulf %180, %181 : vector<8x128xf32>
    %183 = vector.broadcast %162 : vector<1x128xf32> to vector<8x128xf32>
    %184 = arith.addf %182, %183 : vector<8x128xf32>
    %c2_93 = arith.constant 2 : index
    %c0_94 = arith.constant 0 : index
    %c0_95 = arith.constant 0 : index
    %185 = vector.load %arg11[%c2_93, %c0_94, %c0_95] : memref<3x8x128xf32, #tpu.memory_space<vmem>>, vector<1x8x128xf32>
    %186 = vector.shape_cast %185 : vector<1x8x128xf32> to vector<8x128xf32>
    %187 = vector.shape_cast %184 : vector<8x128xf32> to vector<1x8x128xf32>
    tpu.vector_store %arg11[%c2_93, %c0_94, %c0_95], %187 {strides = array<i32>} : memref<3x8x128xf32, #tpu.memory_space<vmem>>, vector<1x8x128xf32>,
    %188 = arith.truncf %184 : vector<8x128xf32> to vector<8x128xbf16>
    %c2_96 = arith.constant 2 : index
    %c0_97 = arith.constant 0 : index
    %c0_98 = arith.constant 0 : index
    %189 = vector.load %arg7[%c2_96, %c0_97, %c0_98] : memref<3x128x128xbf16, #tpu.memory_space<vmem>>, vector<1x128x128xbf16>
    %190 = vector.shape_cast %189 : vector<1x128x128xbf16> to vector<128x128xbf16>
    %cst_99 = arith.constant dense<0.000000e+00> : vector<8x128xf32>
    %191 = tpu.matmul %188, %190, %cst_99 {dimension_numbers = #tpu.dot_dimension_numbers<[1], [0], [0], [1], [0, 0, 1, 1], [], []>} : vector<8x128xbf16>, vector<128x128xbf16>, vector<8x128xf32> -> vector<8x128xf32>
    %cst_100 = arith.constant dense<0.000000e+00> : vector<8xf32>
    %192 = vector.multi_reduction <add>, %191, %cst_100 [1] : vector<8x128xf32> to vector<8xf32>
    %193 = vector.shape_cast %192 : vector<8xf32> to vector<8x1xf32>
    %cst_101 = arith.constant 1.280000e+02 : f32
    %194 = vector.broadcast %cst_101 : f32 to vector<8x1xf32>
    %195 = arith.divf %193, %194 : vector<8x1xf32>
    %196 = vector.broadcast %195 : vector<8x1xf32> to vector<8x128xf32>
    %197 = arith.subf %191, %196 : vector<8x128xf32>
    %198 = arith.mulf %197, %197 : vector<8x128xf32>
    %cst_102 = arith.constant dense<0.000000e+00> : vector<8xf32>
    %199 = vector.multi_reduction <add>, %198, %cst_102 [1] : vector<8x128xf32> to vector<8xf32>
    %200 = vector.shape_cast %199 : vector<8xf32> to vector<8x1xf32>
    %cst_103 = arith.constant 1.280000e+02 : f32
    %201 = vector.broadcast %cst_103 : f32 to vector<8x1xf32>
    %202 = arith.divf %200, %201 : vector<8x1xf32>
    %203 = vector.broadcast %195 : vector<8x1xf32> to vector<8x128xf32>
    %204 = arith.subf %191, %203 : vector<8x128xf32>
    %cst_104 = arith.constant 9.99999974E-6 : f32
    %205 = vector.broadcast %cst_104 : f32 to vector<8x1xf32>
    %206 = arith.addf %202, %205 : vector<8x1xf32>
    %207 = math.rsqrt %206 : vector<8x1xf32>
    %208 = vector.broadcast %207 : vector<8x1xf32> to vector<8x128xf32>
    %209 = arith.mulf %204, %208 : vector<8x128xf32>
    %210 = arith.truncf %209 : vector<8x128xf32> to vector<8x128xbf16>
    %c0_105 = arith.constant 0 : index
    %c0_106 = arith.constant 0 : index
    %211 = vector.load %arg8[%c0_105, %c0_106] : memref<128x512xbf16, #tpu.memory_space<vmem>>, vector<128x512xbf16>
    %cst_107 = arith.constant dense<0.000000e+00> : vector<8x512xf32>
    %212 = tpu.matmul %210, %211, %cst_107 {dimension_numbers = #tpu.dot_dimension_numbers<[1], [0], [0], [1], [0, 0, 1, 1], [], []>} : vector<8x128xbf16>, vector<128x512xbf16>, vector<8x512xf32> -> vector<8x512xf32>
    %c0_108 = arith.constant 0 : index
    %c0_109 = arith.constant 0 : index
    %213 = vector.load %arg9[%c0_108, %c0_109] : memref<1x512xf32, #tpu.memory_space<vmem>>, vector<1x512xf32>
    %214 = vector.broadcast %213 : vector<1x512xf32> to vector<8x512xf32>
    %215 = arith.addf %212, %214 : vector<8x512xf32>
    %cst_110 = arith.constant dense<0xFF800000> : vector<8xf32>
    %216 = vector.multi_reduction <maximumf>, %215, %cst_110 [1] : vector<8x512xf32> to vector<8xf32>
    %217 = vector.shape_cast %216 : vector<8xf32> to vector<8x1xf32>
    %218 = vector.broadcast %217 : vector<8x1xf32> to vector<8x512xf32>
    %219 = arith.subf %215, %218 : vector<8x512xf32>
    %220 = math.exp %219 : vector<8x512xf32>
    %cst_111 = arith.constant dense<0.000000e+00> : vector<8xf32>
    %221 = vector.multi_reduction <add>, %220, %cst_111 [1] : vector<8x512xf32> to vector<8xf32>
    %222 = vector.shape_cast %221 : vector<8xf32> to vector<8x1xf32>
    %223 = tpu.reciprocal %222 {approx = true} : vector<8x1xf32> -> vector<8x1xf32>
    %224 = vector.broadcast %223 : vector<8x1xf32> to vector<8x512xf32>
    %225 = arith.mulf %220, %224 : vector<8x512xf32>
    %c0_112 = arith.constant 0 : index
    %c0_113 = arith.constant 0 : index
    %226 = vector.load %arg10[%c0_112, %c0_113] : memref<8x512xf32, #tpu.memory_space<vmem>>, vector<8x512xf32>
    tpu.vector_store %arg10[%c0_112, %c0_113], %225 {strides = array<i32>} : memref<8x512xf32, #tpu.memory_space<vmem>>, vector<8x512xf32>,
    return
  }
}

</mosaic_0001>

<llo_original>
// kernel: tpu_custom_call.1
$region0: #{tpu_custom_call.1}
  #allocation0 [shape = 'u32[]', space=smem, size = 0x4, offset = 0x4, fixed_abs, tag = 'smem constant byte address 0x4 - core index']
  #allocation1 [shape = 'u32[72,128]{1,0:T(1,128)}', space=vmem, size = 0x9000, scoped, tag = 'internal scratch']
  %s0 = inlined_call_operand.hbm [shape: bf16[8,128], index: 0, kind: input, shape index: {}]
  %s1 = inlined_call_operand.hbm [shape: f32[3,8,128], index: 1, kind: input, shape index: {}]
  %s2 = inlined_call_operand.hbm [shape: bf16[128,128], index: 2, kind: input, shape index: {}]
  %s3 = inlined_call_operand.hbm [shape: bf16[3,256,128], index: 3, kind: input, shape index: {}]
  %s4 = inlined_call_operand.vmem [shape: f32[3,1,128], index: 4, kind: input, shape index: {}]
  %s5 = inlined_call_operand.hbm [shape: f32[3,1,128], index: 5, kind: input, shape index: {}]
  %s6 = inlined_call_operand.hbm [shape: f32[3,1,128], index: 6, kind: input, shape index: {}]
  %s7 = inlined_call_operand.hbm [shape: bf16[3,128,128], index: 7, kind: input, shape index: {}]
  %s8 = inlined_call_operand.hbm [shape: bf16[128,512], index: 8, kind: input, shape index: {}]
  %s9 = inlined_call_operand.vmem [shape: f32[1,512], index: 9, kind: input, shape index: {}]
  %s10 = inlined_call_operand.hbm [shape: f32[8,512], index: 10, kind: output, shape index: {0}]
  %s11 = inlined_call_operand.hbm [shape: f32[3,8,128], index: 11, kind: output, shape index: {1}]
  %12 = xla_tuple %s10, %s11
  %s13 = sld [smem:[#allocation0]]
  $region90: #{tpu_custom_call.1} parent=0
    _
  %s15 = ssub.s32 1, %s13
  %s16 = scalar_select 0, %s15, %s13
  $region1: #{tpu_custom_call.1} parent=0
    #allocation2 [shape = 'u8[2048]{0}', space=vmem, size = 0x800, scoped, tag = 'input window, operand 0, single buffered']
    #allocation3 [shape = 's32[1]{0}', space=sflag, size = 0x4, scoped, tag = 'scoped memory for tpu_custom_call.1']
    #allocation4 [shape = 's32[1]{0}', space=sflag, size = 0x4, scoped, tag = 'scoped memory for tpu_custom_call.1']
    #allocation5 [shape = 'u8[12288]{0}', space=vmem, size = 0x3000, scoped, tag = 'input window, operand 1, single buffered']
    #allocation6 [shape = 's32[1]{0}', space=sflag, size = 0x4, scoped, tag = 'scoped memory for tpu_custom_call.1']
    #allocation7 [shape = 'u8[32768]{0}', space=vmem, size = 0x8000, scoped, tag = 'input window, operand 2, single buffered']
    #allocation8 [shape = 'u8[196608]{0}', space=vmem, size = 0x30000, scoped, tag = 'input window, operand 3, single buffered']
    #allocation9 [shape = 's32[1]{0}', space=sflag, size = 0x4, scoped, tag = 'scoped memory for tpu_custom_call.1']
    #allocation10 [shape = 'u8[1536]{0}', space=vmem, size = 0x800, scoped, tag = 'input window, operand 5, single buffered']
    #allocation11 [shape = 'u8[1536]{0}', space=vmem, size = 0x800, scoped, tag = 'input window, operand 6, single buffered']
    #allocation12 [shape = 's32[1]{0}', space=sflag, size = 0x4, scoped, tag = 'scoped memory for tpu_custom_call.1']
    #allocation13 [shape = 'u8[98304]{0}', space=vmem, size = 0x18000, scoped, tag = 'input window, operand 7, single buffered']
    #allocation14 [shape = 'u8[131072]{0}', space=vmem, size = 0x20000, scoped, tag = 'input window, operand 8, single buffered']
    #allocation15 [shape = 's32[1]{0}', space=sflag, size = 0x4, scoped, tag = 'scoped memory for tpu_custom_call.1']
    #allocation16 [shape = 'u8[16384]{0}', space=vmem, size = 0x4000, scoped, tag = 'output window, operand 0, single buffered']
    #allocation17 [shape = 'u8[12288]{0}', space=vmem, size = 0x3000, scoped, tag = 'output window, operand 1, single buffered']
    #allocation18 [shape = 's32[1]{0}', space=sflag, size = 0x4, scoped, tag = 'scoped memory for tpu_custom_call.1']
    %17 = vsyncpa [#allocation3], 0
    %18 = vsyncpa [#allocation6], 0
    %19 = vsyncpa [#allocation9], 0
    %20 = vsyncpa [#allocation12], 0
    %21 = vsyncpa [#allocation15], 0
    %22 = vsyncpa [#allocation4], 0
    %23 = vsyncpa [#allocation18], 0
    // Predicated region
    $region2: #{tpu_custom_call.1} parent=1 // pred_check
      _
    $region3: #{tpu_custom_call.1} parent=1 // pred_check_branch
      %25 = sbr.rel (0) target = $region5
    $region4: #{tpu_custom_call.1} parent=1 // pred_region
      %27 = vsyncadd [#allocation3], 0
      %s29 = sshll.u32 %s0, 4
      %s30 = int_to_ptr.hbm [resolvable:$true] %s29
      %s31 = sshll.u32 [#allocation2], 4
      %s32 = int_to_ptr.vmem [resolvable:$true] %s31
      %34 = dma.hbm_to_vmem [thread:$0]  %s30, 64, %s32, [#allocation3]
    $region5: #{tpu_custom_call.1} parent=1 // pred_fallthru
      _
    // Predicated region
    $region6: #{tpu_custom_call.1} parent=1 // pred_check
      _
    $region7: #{tpu_custom_call.1} parent=1 // pred_check_branch
      %36 = sbr.rel (0) target = $region9
    $region8: #{tpu_custom_call.1} parent=1 // pred_region
      %38 = vsyncadd [#allocation6], 0
      %s39 = sshll.u32 %s1, 4
      %s40 = int_to_ptr.hbm [resolvable:$true] %s39
      %s41 = sshll.u32 [#allocation5], 4
      %s42 = int_to_ptr.vmem [resolvable:$true] %s41
      %47 = dma.hbm_to_vmem [thread:$0]  %s40, 384, %s42, [#allocation6], 128, 128, 8
    $region9: #{tpu_custom_call.1} parent=1 // pred_fallthru
      _
    // Predicated region
    $region10: #{tpu_custom_call.1} parent=1 // pred_check
      _
    $region11: #{tpu_custom_call.1} parent=1 // pred_check_branch
      %49 = sbr.rel (0) target = $region13
    $region12: #{tpu_custom_call.1} parent=1 // pred_region
      %51 = vsyncadd [#allocation6], 0
      %s52 = sshll.u32 %s2, 4
      %s53 = int_to_ptr.hbm [resolvable:$true] %s52
      %s54 = sshll.u32 [#allocation7], 4
      %s55 = int_to_ptr.vmem [resolvable:$true] %s54
      %60 = dma.hbm_to_vmem [thread:$0]  %s53, 1024, %s55, [#allocation6], 64, 64, 4
    $region13: #{tpu_custom_call.1} parent=1 // pred_fallthru
      _
    // Predicated region
    $region14: #{tpu_custom_call.1} parent=1 // pred_check
      _
    $region15: #{tpu_custom_call.1} parent=1 // pred_check_branch
      %62 = sbr.rel (0) target = $region17
    $region16: #{tpu_custom_call.1} parent=1 // pred_region
      %64 = vsyncadd [#allocation9], 0
      %s65 = sshll.u32 %s3, 4
      %s66 = int_to_ptr.hbm [resolvable:$true] %s65
      %s67 = sshll.u32 [#allocation8], 4
      %s68 = int_to_ptr.vmem [resolvable:$true] %s67
      %73 = dma.hbm_to_vmem [thread:$0]  %s66, 6144, %s68, [#allocation9], 64, 64, 4
    $region17: #{tpu_custom_call.1} parent=1 // pred_fallthru
      _
    // Predicated region
    $region18: #{tpu_custom_call.1} parent=1 // pred_check
      _
    $region19: #{tpu_custom_call.1} parent=1 // pred_check_branch
      %75 = sbr.rel (0) target = $region21
    $region20: #{tpu_custom_call.1} parent=1 // pred_region
      _
    $region21: #{tpu_custom_call.1} parent=1 // pred_fallthru
      _
    // Predicated region
    $region22: #{tpu_custom_call.1} parent=1 // pred_check
      _
    $region23: #{tpu_custom_call.1} parent=1 // pred_check_branch
      %77 = sbr.rel (0) target = $region25
    $region24: #{tpu_custom_call.1} parent=1 // pred_region
      %79 = vsyncadd [#allocation9], 0
      %s80 = sshll.u32 %s5, 4
      %s81 = int_to_ptr.hbm [resolvable:$true] %s80
      %s82 = sshll.u32 [#allocation10], 4
      %s83 = int_to_ptr.vmem [resolvable:$true] %s82
      %88 = dma.hbm_to_vmem [thread:$0]  %s81, 48, %s83, [#allocation9], 16, 16, 1
    $region25: #{tpu_custom_call.1} parent=1 // pred_fallthru
      _
    // Predicated region
    $region26: #{tpu_custom_call.1} parent=1 // pred_check
      _
    $region27: #{tpu_custom_call.1} parent=1 // pred_check_branch
      %90 = sbr.rel (0) target = $region29
    $region28: #{tpu_custom_call.1} parent=1 // pred_region
      %92 = vsyncadd [#allocation12], 0
      %s93 = sshll.u32 %s6, 4
      %s94 = int_to_ptr.hbm [resolvable:$true] %s93
      %s95 = sshll.u32 [#allocation11], 4
      %s96 = int_to_ptr.vmem [resolvable:$true] %s95
      %101 = dma.hbm_to_vmem [thread:$0]  %s94, 48, %s96, [#allocation12], 16, 16, 1
    $region29: #{tpu_custom_call.1} parent=1 // pred_fallthru
      _
    // Predicated region
    $region30: #{tpu_custom_call.1} parent=1 // pred_check
      _
    $region31: #{tpu_custom_call.1} parent=1 // pred_check_branch
      %103 = sbr.rel (0) target = $region33
    $region32: #{tpu_custom_call.1} parent=1 // pred_region
      %105 = vsyncadd [#allocation12], 0
      %s106 = sshll.u32 %s7, 4
      %s107 = int_to_ptr.hbm [resolvable:$true] %s106
      %s108 = sshll.u32 [#allocation13], 4
      %s109 = int_to_ptr.vmem [resolvable:$true] %s108
      %114 = dma.hbm_to_vmem [thread:$0]  %s107, 3072, %s109, [#allocation12], 64, 64, 4
    $region33: #{tpu_custom_call.1} parent=1 // pred_fallthru
      _
    // Predicated region
    $region34: #{tpu_custom_call.1} parent=1 // pred_check
      _
    $region35: #{tpu_custom_call.1} parent=1 // pred_check_branch
      %116 = sbr.rel (0) target = $region37
    $region36: #{tpu_custom_call.1} parent=1 // pred_region
      %118 = vsyncadd [#allocation15], 0
      %s119 = sshll.u32 %s8, 4
      %s120 = int_to_ptr.hbm [resolvable:$true] %s119
      %s121 = sshll.u32 [#allocation14], 4
      %s122 = int_to_ptr.vmem [resolvable:$true] %s121
      %127 = dma.hbm_to_vmem [thread:$0]  %s120, 4096, %s122, [#allocation15], 256, 256, 16
    $region37: #{tpu_custom_call.1} parent=1 // pred_fallthru
      _
    // Predicated region
    $region38: #{tpu_custom_call.1} parent=1 // pred_check
      _
    $region39: #{tpu_custom_call.1} parent=1 // pred_check_branch
      %129 = sbr.rel (0) target = $region41
    $region40: #{tpu_custom_call.1} parent=1 // pred_region
      _
    $region41: #{tpu_custom_call.1} parent=1 // pred_fallthru
      _
    // Predicated region
    $region42: #{tpu_custom_call.1} parent=1 // pred_check
      _
    $region43: #{tpu_custom_call.1} parent=1 // pred_check_branch
      %131 = sbr.rel (0) target = $region45
    $region44: #{tpu_custom_call.1} parent=1 // pred_region
      %133 = dma.done [#allocation3], 64
    $region45: #{tpu_custom_call.1} parent=1 // pred_fallthru
      _
    // Predicated region
    $region46: #{tpu_custom_call.1} parent=1 // pred_check
      _
    $region47: #{tpu_custom_call.1} parent=1 // pred_check_branch
      %135 = sbr.rel (0) target = $region49
    $region48: #{tpu_custom_call.1} parent=1 // pred_region
      %137 = dma.done [#allocation6], 384
    $region49: #{tpu_custom_call.1} parent=1 // pred_fallthru
      _
    // Predicated region
    $region50: #{tpu_custom_call.1} parent=1 // pred_check
      _
    $region51: #{tpu_custom_call.1} parent=1 // pred_check_branch
      %139 = sbr.rel (0) target = $region53
    $region52: #{tpu_custom_call.1} parent=1 // pred_region
      %141 = dma.done [#allocation6], 1024
    $region53: #{tpu_custom_call.1} parent=1 // pred_fallthru
      _
    // Predicated region
    $region54: #{tpu_custom_call.1} parent=1 // pred_check
      _
    $region55: #{tpu_custom_call.1} parent=1 // pred_check_branch
      %143 = sbr.rel (0) target = $region57
    $region56: #{tpu_custom_call.1} parent=1 // pred_region
      %145 = dma.done [#allocation9], 6144
    $region57: #{tpu_custom_call.1} parent=1 // pred_fallthru
      _
    // Predicated region
    $region58: #{tpu_custom_call.1} parent=1 // pred_check
      _
    $region59: #{tpu_custom_call.1} parent=1 // pred_check_branch
      %147 = sbr.rel (0) target = $region61
    $region60: #{tpu_custom_call.1} parent=1 // pred_region
      %149 = dma.done [#allocation9], 48
    $region61: #{tpu_custom_call.1} parent=1 // pred_fallthru
      _
    // Predicated region
    $region62: #{tpu_custom_call.1} parent=1 // pred_check
      _
    $region63: #{tpu_custom_call.1} parent=1 // pred_check_branch
      %151 = sbr.rel (0) target = $region65
    $region64: #{tpu_custom_call.1} parent=1 // pred_region
      %153 = dma.done [#allocation12], 48
    $region65: #{tpu_custom_call.1} parent=1 // pred_fallthru
      _
    // Predicated region
    $region66: #{tpu_custom_call.1} parent=1 // pred_check
      _
    $region67: #{tpu_custom_call.1} parent=1 // pred_check_branch
      %155 = sbr.rel (0) target = $region69
    $region68: #{tpu_custom_call.1} parent=1 // pred_region
      %157 = dma.done [#allocation12], 3072
    $region69: #{tpu_custom_call.1} parent=1 // pred_fallthru
      _
    // Predicated region
    $region70: #{tpu_custom_call.1} parent=1 // pred_check
      _
    $region71: #{tpu_custom_call.1} parent=1 // pred_check_branch
      %159 = sbr.rel (0) target = $region73
    $region72: #{tpu_custom_call.1} parent=1 // pred_region
      %161 = dma.done [#allocation15], 4096
    $region73: #{tpu_custom_call.1} parent=1 // pred_fallthru
      _
    %v162 = vld [vmem:[#allocation2] sm:$0xf]
    %v163 = vld [vmem:[#allocation7] sm:$0xf]
    %v164 = vld [vmem:[#allocation7 + $0x4] sm:$0xf]
    %v165 = vld [vmem:[#allocation7 + $0x8] sm:$0xf]
    %v166 = vld [vmem:[#allocation7 + $0xc] sm:$0xf]
    %v167 = vld [vmem:[#allocation7 + $0x10] sm:$0xf]
    %v168 = vld [vmem:[#allocation7 + $0x14] sm:$0xf]
    %v169 = vld [vmem:[#allocation7 + $0x18] sm:$0xf]
    %v170 = vld [vmem:[#allocation7 + $0x1c] sm:$0xf]
    %v171 = vld [vmem:[#allocation7 + $0x20] sm:$0xf]
    %v172 = vld [vmem:[#allocation7 + $0x24] sm:$0xf]
    %v173 = vld [vmem:[#allocation7 + $0x28] sm:$0xf]
    %v174 = vld [vmem:[#allocation7 + $0x2c] sm:$0xf]
    %v175 = vld [vmem:[#allocation7 + $0x30] sm:$0xf]
    %v176 = vld [vmem:[#allocation7 + $0x34] sm:$0xf]
    %v177 = vld [vmem:[#allocation7 + $0x38] sm:$0xf]
    %v178 = vld [vmem:[#allocation7 + $0x3c] sm:$0xf]
    %v195 = vunpack.c.l.b16 %v163
    %v196 = vunpack.c.l.b16 %v164
    %v197 = vunpack.c.l.b16 %v165
    %v198 = vunpack.c.l.b16 %v166
    %v199 = vunpack.c.l.b16 %v167
    %v200 = vunpack.c.l.b16 %v168
    %v201 = vunpack.c.l.b16 %v169
    %v202 = vunpack.c.l.b16 %v170
    %v203 = vunpack.c.l.b16 %v171
    %v204 = vunpack.c.l.b16 %v172
    %v205 = vunpack.c.l.b16 %v173
    %v206 = vunpack.c.l.b16 %v174
    %v207 = vunpack.c.l.b16 %v175
    %v208 = vunpack.c.l.b16 %v176
    %v209 = vunpack.c.l.b16 %v177
    %v210 = vunpack.c.l.b16 %v178
    %v211 = vpack.c.b16 %v196, %v195
    %v212 = vpack.c.b16 %v198, %v197
    %v213 = vpack.c.b16 %v200, %v199
    %v214 = vpack.c.b16 %v202, %v201
    %v215 = vpack.c.b16 %v204, %v203
    %v216 = vpack.c.b16 %v206, %v205
    %v217 = vpack.c.b16 %v208, %v207
    %v218 = vpack.c.b16 %v210, %v209
    %227 = vmatpush.bf16.msra.mxu0 %v218
    %228 = vmatpush.bf16.msra.mxu0 %v217
    %229 = vmatpush.bf16.msra.mxu0 %v216
    %230 = vmatpush.bf16.msra.mxu0 %v215
    %231 = vmatpush.bf16.msra.mxu0 %v214
    %232 = vmatpush.bf16.msra.mxu0 %v213
    %233 = vmatpush.bf16.msra.mxu0 %v212
    %234 = vmatpush.bf16.msra.mxu0 %v211
    %235 = vmatmul.bf16.gmra.mxu0 %v162
    %v236 = vpop.f32.mrf.mxu0
    %v237 = vadd.f32 0.0, %v236
    %v238 = vpop.f32.mrf.mxu0
    %239 = vdwg.mxu0
    %240 = vadd.xlane.f32.xlu0 %v237
    %v241 = vpop.xlane.xlu0 %240
    %v242 = vrcp.pop 128.0
    %v243 = vmul.f32 128.0, %v242
    %v244 = vsub.f32 1.0, %v243
    %v245 = vmul.f32 %v242, %v244
    %v246 = vadd.f32 %v242, %v245
    %vm247 = vweird.f32 %v242
    %v248 = vsel %vm247, %v242, %v246
    %v249 = vmul.f32 %v241, %v248
    %v250 = vsub.f32 %v237, %v249
    %v251 = vmul.f32 %v250, %v250
    %252 = vadd.xlane.f32.xlu0 %v251
    %v253 = vpop.xlane.xlu0 %252
    %v254 = vmul.f32 %v253, %v248
    %v255 = vadd.f32 %v254, 1e-05
    %v256 = vrsqrt.pop %v255
    %v257 = vmul.f32 %v256, %v255
    %v258 = vmul.f32 %v257, %v256
    %v259 = vmul.f32 0.5, %v258
    %v260 = vsub.f32 1.5, %v259
    %v261 = vmul.f32 %v256, %v260
    %vm262 = vweird.f32 %v255
    %vm263 = vweird.f32 %v256
    %vm264 = vmor %vm262, %vm263
    %v265 = vsel %vm264, %v256, %v261
    %v266 = vmul.f32 %v250, %v265
    %v267 = vld [vmem:[#allocation5] sm:$0xff]
    %v268 = vpack.c.bf16 %v266, %v266
    %v269 = vpack.c.bf16 %v267, %v267
    %v270 = vld [vmem:[#allocation8] sm:$0xf]
    %v271 = vld [vmem:[#allocation8 + $0x4] sm:$0xf]
    %v272 = vld [vmem:[#allocation8 + $0x8] sm:$0xf]
    %v273 = vld [vmem:[#allocation8 + $0xc] sm:$0xf]
    %v274 = vld [vmem:[#allocation8 + $0x10] sm:$0xf]
    %v275 = vld [vmem:[#allocation8 + $0x14] sm:$0xf]
    %v276 = vld [vmem:[#allocation8 + $0x18] sm:$0xf]
    %v277 = vld [vmem:[#allocation8 + $0x1c] sm:$0xf]
    %v278 = vld [vmem:[#allocation8 + $0x20] sm:$0xf]
    %v279 = vld [vmem:[#allocation8 + $0x24] sm:$0xf]
    %v280 = vld [vmem:[#allocation8 + $0x28] sm:$0xf]
    %v281 = vld [vmem:[#allocation8 + $0x2c] sm:$0xf]
    %v282 = vld [vmem:[#allocation8 + $0x30] sm:$0xf]
    %v283 = vld [vmem:[#allocation8 + $0x34] sm:$0xf]
    %v284 = vld [vmem:[#allocation8 + $0x38] sm:$0xf]
    %v285 = vld [vmem:[#allocation8 + $0x3c] sm:$0xf]
    %v286 = vld [vmem:[#allocation8 + $0x40] sm:$0xf]
    %v287 = vld [vmem:[#allocation8 + $0x44] sm:$0xf]
    %v288 = vld [vmem:[#allocation8 + $0x48] sm:$0xf]
    %v289 = vld [vmem:[#allocation8 + $0x4c] sm:$0xf]
    %v290 = vld [vmem:[#allocation8 + $0x50] sm:$0xf]
    %v291 = vld [vmem:[#allocation8 + $0x54] sm:$0xf]
    %v292 = vld [vmem:[#allocation8 + $0x58] sm:$0xf]
    %v293 = vld [vmem:[#allocation8 + $0x5c] sm:$0xf]
    %v294 = vld [vmem:[#allocation8 + $0x60] sm:$0xf]
    %v295 = vld [vmem:[#allocation8 + $0x64] sm:$0xf]
    %v296 = vld [vmem:[#allocation8 + $0x68] sm:$0xf]
    %v297 = vld [vmem:[#allocation8 + $0x6c] sm:$0xf]
    %v298 = vld [vmem:[#allocation8 + $0x70] sm:$0xf]
    %v299 = vld [vmem:[#allocation8 + $0x74] sm:$0xf]
    %v300 = vld [vmem:[#allocation8 + $0x78] sm:$0xf]
    %v301 = vld [vmem:[#allocation8 + $0x7c] sm:$0xf]
    %v302 = vld [vmem:[%s4] sm:$0x1]
    %v304 = vperm.slane %v302, 0
    %v338 = vunpack.c.l.b16 %v270
    %v339 = vunpack.c.l.b16 %v271
    %v340 = vunpack.c.l.b16 %v272
    %v341 = vunpack.c.l.b16 %v273
    %v342 = vunpack.c.l.b16 %v274
    %v343 = vunpack.c.l.b16 %v275
    %v344 = vunpack.c.l.b16 %v276
    %v345 = vunpack.c.l.b16 %v277
    %v346 = vunpack.c.l.b16 %v278
    %v347 = vunpack.c.l.b16 %v279
    %v348 = vunpack.c.l.b16 %v280
    %v349 = vunpack.c.l.b16 %v281
    %v350 = vunpack.c.l.b16 %v282
    %v351 = vunpack.c.l.b16 %v283
    %v352 = vunpack.c.l.b16 %v284
    %v353 = vunpack.c.l.b16 %v285
    %v354 = vunpack.c.l.b16 %v286
    %v355 = vunpack.c.l.b16 %v287
    %v356 = vunpack.c.l.b16 %v288
    %v357 = vunpack.c.l.b16 %v289
    %v358 = vunpack.c.l.b16 %v290
    %v359 = vunpack.c.l.b16 %v291
    %v360 = vunpack.c.l.b16 %v292
    %v361 = vunpack.c.l.b16 %v293
    %v362 = vunpack.c.l.b16 %v294
    %v363 = vunpack.c.l.b16 %v295
    %v364 = vunpack.c.l.b16 %v296
    %v365 = vunpack.c.l.b16 %v297
    %v366 = vunpack.c.l.b16 %v298
    %v367 = vunpack.c.l.b16 %v299
    %v368 = vunpack.c.l.b16 %v300
    %v369 = vunpack.c.l.b16 %v301
    %v370 = vpack.c.b16 %v339, %v338
    %v371 = vpack.c.b16 %v341, %v340
    %v372 = vpack.c.b16 %v343, %v342
    %v373 = vpack.c.b16 %v345, %v344
    %v374 = vpack.c.b16 %v347, %v346
    %v375 = vpack.c.b16 %v349, %v348
    %v376 = vpack.c.b16 %v351, %v350
    %v377 = vpack.c.b16 %v353, %v352
    %v378 = vpack.c.b16 %v355, %v354
    %v379 = vpack.c.b16 %v357, %v356
    %v380 = vpack.c.b16 %v359, %v358
    %v381 = vpack.c.b16 %v361, %v360
    %v382 = vpack.c.b16 %v363, %v362
    %v383 = vpack.c.b16 %v365, %v364
    %v384 = vpack.c.b16 %v367, %v366
    %v385 = vpack.c.b16 %v369, %v368
    %402 = vmatpush.bf16.msra.mxu0 %v377
    %403 = vmatpush.bf16.msra.mxu0 %v376
    %404 = vmatpush.bf16.msra.mxu0 %v375
    %405 = vmatpush.bf16.msra.mxu0 %v374
    %406 = vmatpush.bf16.msra.mxu0 %v373
    %407 = vmatpush.bf16.msra.mxu0 %v372
    %408 = vmatpush.bf16.msra.mxu0 %v371
    %409 = vmatpush.bf16.msra.mxu0 %v370
    %410 = vmatmul.bf16.gmra.mxu0 %v268
    %v411 = vpop.f32.mrf.mxu0
    %v412 = vadd.f32 %v304, %v411
    %v413 = vpop.f32.mrf.mxu0
    %414 = vdwg.mxu0
    %415 = vmatpush.bf16.msra.mxu0 %v385
    %416 = vmatpush.bf16.msra.mxu0 %v384
    %417 = vmatpush.bf16.msra.mxu0 %v383
    %418 = vmatpush.bf16.msra.mxu0 %v382
    %419 = vmatpush.bf16.msra.mxu0 %v381
    %420 = vmatpush.bf16.msra.mxu0 %v380
    %421 = vmatpush.bf16.msra.mxu0 %v379
    %422 = vmatpush.bf16.msra.mxu0 %v378
    %423 = vmatmul.bf16.gmra.mxu0 %v269
    %v424 = vpop.f32.mrf.mxu0
    %v425 = vadd.f32 %v412, %v424
    %v426 = vpop.f32.mrf.mxu0
    %427 = vdwg.mxu0
    %v428 = vadd.f32 %v267, %v425
    %v429 = vld [vmem:[#allocation10] sm:$0x1]
    %v430 = vld [vmem:[#allocation11] sm:$0x1]
    %431 = vadd.xlane.f32.xlu0 %v428
    %v432 = vpop.xlane.xlu0 %431
    %v433 = vmul.f32 %v432, %v248
    %v434 = vsub.f32 %v428, %v433
    %v435 = vmul.f32 %v434, %v434
    %436 = vadd.xlane.f32.xlu0 %v435
    %v437 = vpop.xlane.xlu0 %436
    %v438 = vmul.f32 %v437, %v248
    %v439 = vadd.f32 %v438, 1e-05
    %v440 = vrsqrt.pop %v439
    %v441 = vmul.f32 %v440, %v439
    %v442 = vmul.f32 %v441, %v440
    %v443 = vmul.f32 0.5, %v442
    %v444 = vsub.f32 1.5, %v443
    %v445 = vmul.f32 %v440, %v444
    %vm446 = vweird.f32 %v439
    %vm447 = vweird.f32 %v440
    %vm448 = vmor %vm446, %vm447
    %v449 = vsel %vm448, %v440, %v445
    %v450 = vmul.f32 %v434, %v449
    %v452 = vperm.slane %v429, 0
    %v454 = vmul.f32 %v450, %v452
    %v456 = vperm.slane %v430, 0
    %v458 = vadd.f32 %v454, %v456
    %459 = vst [vmem:[#allocation17] sm:$0xff] %v458
    %v460 = vpack.c.bf16 %v458, %v458
    %v461 = vld [vmem:[#allocation13] sm:$0xf]
    %v462 = vld [vmem:[#allocation13 + $0x4] sm:$0xf]
    %v463 = vld [vmem:[#allocation13 + $0x8] sm:$0xf]
    %v464 = vld [vmem:[#allocation13 + $0xc] sm:$0xf]
    %v465 = vld [vmem:[#allocation13 + $0x10] sm:$0xf]
    %v466 = vld [vmem:[#allocation13 + $0x14] sm:$0xf]
    %v467 = vld [vmem:[#allocation13 + $0x18] sm:$0xf]
    %v468 = vld [vmem:[#allocation13 + $0x1c] sm:$0xf]
    %v469 = vld [vmem:[#allocation13 + $0x20] sm:$0xf]
    %v470 = vld [vmem:[#allocation13 + $0x24] sm:$0xf]
    %v471 = vld [vmem:[#allocation13 + $0x28] sm:$0xf]
    %v472 = vld [vmem:[#allocation13 + $0x2c] sm:$0xf]
    %v473 = vld [vmem:[#allocation13 + $0x30] sm:$0xf]
    %v474 = vld [vmem:[#allocation13 + $0x34] sm:$0xf]
    %v475 = vld [vmem:[#allocation13 + $0x38] sm:$0xf]
    %v476 = vld [vmem:[#allocation13 + $0x3c] sm:$0xf]
    %v493 = vunpack.c.l.b16 %v461
    %v494 = vunpack.c.l.b16 %v462
    %v495 = vunpack.c.l.b16 %v463
    %v496 = vunpack.c.l.b16 %v464
    %v497 = vunpack.c.l.b16 %v465
    %v498 = vunpack.c.l.b16 %v466
    %v499 = vunpack.c.l.b16 %v467
    %v500 = vunpack.c.l.b16 %v468
    %v501 = vunpack.c.l.b16 %v469
    %v502 = vunpack.c.l.b16 %v470
    %v503 = vunpack.c.l.b16 %v471
    %v504 = vunpack.c.l.b16 %v472
    %v505 = vunpack.c.l.b16 %v473
    %v506 = vunpack.c.l.b16 %v474
    %v507 = vunpack.c.l.b16 %v475
    %v508 = vunpack.c.l.b16 %v476
    %v509 = vpack.c.b16 %v494, %v493
    %v510 = vpack.c.b16 %v496, %v495
    %v511 = vpack.c.b16 %v498, %v497
    %v512 = vpack.c.b16 %v500, %v499
    %v513 = vpack.c.b16 %v502, %v501
    %v514 = vpack.c.b16 %v504, %v503
    %v515 = vpack.c.b16 %v506, %v505
    %v516 = vpack.c.b16 %v508, %v507
    %525 = vmatpush.bf16.msra.mxu0 %v516
    %526 = vmatpush.bf16.msra.mxu0 %v515
    %527 = vmatpush.bf16.msra.mxu0 %v514
    %528 = vmatpush.bf16.msra.mxu0 %v513
    %529 = vmatpush.bf16.msra.mxu0 %v512
    %530 = vmatpush.bf16.msra.mxu0 %v511
    %531 = vmatpush.bf16.msra.mxu0 %v510
    %532 = vmatpush.bf16.msra.mxu0 %v509
    %533 = vmatmul.bf16.gmra.mxu0 %v460
    %v534 = vpop.f32.mrf.mxu0
    %v535 = vadd.f32 0.0, %v534
    %v536 = vpop.f32.mrf.mxu0
    %537 = vdwg.mxu0
    %538 = vadd.xlane.f32.xlu0 %v535
    %v539 = vpop.xlane.xlu0 %538
    %v540 = vmul.f32 %v539, %v248
    %v541 = vsub.f32 %v535, %v540
    %v542 = vmul.f32 %v541, %v541
    %543 = vadd.xlane.f32.xlu0 %v542
    %v544 = vpop.xlane.xlu0 %543
    %v545 = vmul.f32 %v544, %v248
    %v546 = vadd.f32 %v545, 1e-05
    %v547 = vrsqrt.pop %v546
    %v548 = vmul.f32 %v547, %v546
    %v549 = vmul.f32 %v548, %v547
    %v550 = vmul.f32 0.5, %v549
    %v551 = vsub.f32 1.5, %v550
    %v552 = vmul.f32 %v547, %v551
    %vm553 = vweird.f32 %v546
    %vm554 = vweird.f32 %v547
    %vm555 = vmor %vm553, %vm554
    %v556 = vsel %vm555, %v547, %v552
    %v557 = vmul.f32 %v541, %v556
    %s558 = scalar_lea.vmem [#allocation5], 8
    %v559 = vld [vmem:[%s558] sm:$0xff]
    %v560 = vpack.c.bf16 %v557, %v557
    %v561 = vpack.c.bf16 %v559, %v559
    %s562 = scalar_lea.vmem [#allocation8], 128
    %v563 = vld [vmem:[%s562] sm:$0xf]
    %v564 = vld [vmem:[%s562 + $0x4] sm:$0xf]
    %v565 = vld [vmem:[%s562 + $0x8] sm:$0xf]
    %v566 = vld [vmem:[%s562 + $0xc] sm:$0xf]
    %v567 = vld [vmem:[%s562 + $0x10] sm:$0xf]
    %v568 = vld [vmem:[%s562 + $0x14] sm:$0xf]
    %v569 = vld [vmem:[%s562 + $0x18] sm:$0xf]
    %v570 = vld [vmem:[%s562 + $0x1c] sm:$0xf]
    %v571 = vld [vmem:[%s562 + $0x20] sm:$0xf]
    %v572 = vld [vmem:[%s562 + $0x24] sm:$0xf]
    %v573 = vld [vmem:[%s562 + $0x28] sm:$0xf]
    %v574 = vld [vmem:[%s562 + $0x2c] sm:$0xf]
    %v575 = vld [vmem:[%s562 + $0x30] sm:$0xf]
    %v576 = vld [vmem:[%s562 + $0x34] sm:$0xf]
    %v577 = vld [vmem:[%s562 + $0x38] sm:$0xf]
    %v578 = vld [vmem:[%s562 + $0x3c] sm:$0xf]
    %v579 = vld [vmem:[%s562 + $0x40] sm:$0xf]
    %v580 = vld [vmem:[%s562 + $0x44] sm:$0xf]
    %v581 = vld [vmem:[%s562 + $0x48] sm:$0xf]
    %v582 = vld [vmem:[%s562 + $0x4c] sm:$0xf]
    %v583 = vld [vmem:[%s562 + $0x50] sm:$0xf]
    %v584 = vld [vmem:[%s562 + $0x54] sm:$0xf]
    %v585 = vld [vmem:[%s562 + $0x58] sm:$0xf]
    %v586 = vld [vmem:[%s562 + $0x5c] sm:$0xf]
    %v587 = vld [vmem:[%s562 + $0x60] sm:$0xf]
    %v588 = vld [vmem:[%s562 + $0x64] sm:$0xf]
    %v589 = vld [vmem:[%s562 + $0x68] sm:$0xf]
    %v590 = vld [vmem:[%s562 + $0x6c] sm:$0xf]
    %v591 = vld [vmem:[%s562 + $0x70] sm:$0xf]
    %v592 = vld [vmem:[%s562 + $0x74] sm:$0xf]
    %v593 = vld [vmem:[%s562 + $0x78] sm:$0xf]
    %v594 = vld [vmem:[%s562 + $0x7c] sm:$0xf]
    %s595 = scalar_lea.vmem %s4, 1
    %v596 = vld [vmem:[%s595] sm:$0x1]
    %v598 = vperm.slane %v596, 0
    %v632 = vunpack.c.l.b16 %v563
    %v633 = vunpack.c.l.b16 %v564
    %v634 = vunpack.c.l.b16 %v565
    %v635 = vunpack.c.l.b16 %v566
    %v636 = vunpack.c.l.b16 %v567
    %v637 = vunpack.c.l.b16 %v568
    %v638 = vunpack.c.l.b16 %v569
    %v639 = vunpack.c.l.b16 %v570
    %v640 = vunpack.c.l.b16 %v571
    %v641 = vunpack.c.l.b16 %v572
    %v642 = vunpack.c.l.b16 %v573
    %v643 = vunpack.c.l.b16 %v574
    %v644 = vunpack.c.l.b16 %v575
    %v645 = vunpack.c.l.b16 %v576
    %v646 = vunpack.c.l.b16 %v577
    %v647 = vunpack.c.l.b16 %v578
    %v648 = vunpack.c.l.b16 %v579
    %v649 = vunpack.c.l.b16 %v580
    %v650 = vunpack.c.l.b16 %v581
    %v651 = vunpack.c.l.b16 %v582
    %v652 = vunpack.c.l.b16 %v583
    %v653 = vunpack.c.l.b16 %v584
    %v654 = vunpack.c.l.b16 %v585
    %v655 = vunpack.c.l.b16 %v586
    %v656 = vunpack.c.l.b16 %v587
    %v657 = vunpack.c.l.b16 %v588
    %v658 = vunpack.c.l.b16 %v589
    %v659 = vunpack.c.l.b16 %v590
    %v660 = vunpack.c.l.b16 %v591
    %v661 = vunpack.c.l.b16 %v592
    %v662 = vunpack.c.l.b16 %v593
    %v663 = vunpack.c.l.b16 %v594
    %v664 = vpack.c.b16 %v633, %v632
    %v665 = vpack.c.b16 %v635, %v634
    %v666 = vpack.c.b16 %v637, %v636
    %v667 = vpack.c.b16 %v639, %v638
    %v668 = vpack.c.b16 %v641, %v640
    %v669 = vpack.c.b16 %v643, %v642
    %v670 = vpack.c.b16 %v645, %v644
    %v671 = vpack.c.b16 %v647, %v646
    %v672 = vpack.c.b16 %v649, %v648
    %v673 = vpack.c.b16 %v651, %v650
    %v674 = vpack.c.b16 %v653, %v652
    %v675 = vpack.c.b16 %v655, %v654
    %v676 = vpack.c.b16 %v657, %v656
    %v677 = vpack.c.b16 %v659, %v658
    %v678 = vpack.c.b16 %v661, %v660
    %v679 = vpack.c.b16 %v663, %v662
    %696 = vmatpush.bf16.msra.mxu0 %v671
    %697 = vmatpush.bf16.msra.mxu0 %v670
    %698 = vmatpush.bf16.msra.mxu0 %v669
    %699 = vmatpush.bf16.msra.mxu0 %v668
    %700 = vmatpush.bf16.msra.mxu0 %v667
    %701 = vmatpush.bf16.msra.mxu0 %v666
    %702 = vmatpush.bf16.msra.mxu0 %v665
    %703 = vmatpush.bf16.msra.mxu0 %v664
    %704 = vmatmul.bf16.gmra.mxu0 %v560
    %v705 = vpop.f32.mrf.mxu0
    %v706 = vadd.f32 %v598, %v705
    %v707 = vpop.f32.mrf.mxu0
    %708 = vdwg.mxu0
    %709 = vmatpush.bf16.msra.mxu0 %v679
    %710 = vmatpush.bf16.msra.mxu0 %v678
    %711 = vmatpush.bf16.msra.mxu0 %v677
    %712 = vmatpush.bf16.msra.mxu0 %v676
    %713 = vmatpush.bf16.msra.mxu0 %v675
    %714 = vmatpush.bf16.msra.mxu0 %v674
    %715 = vmatpush.bf16.msra.mxu0 %v673
    %716 = vmatpush.bf16.msra.mxu0 %v672
    %717 = vmatmul.bf16.gmra.mxu0 %v561
    %v718 = vpop.f32.mrf.mxu0
    %v719 = vadd.f32 %v706, %v718
    %v720 = vpop.f32.mrf.mxu0
    %721 = vdwg.mxu0
    %v722 = vadd.f32 %v559, %v719
    %s723 = scalar_lea.vmem [#allocation10], 1
    %v724 = vld [vmem:[%s723] sm:$0x1]
    %s725 = scalar_lea.vmem [#allocation11], 1
    %v726 = vld [vmem:[%s725] sm:$0x1]
    %727 = vadd.xlane.f32.xlu0 %v722
    %v728 = vpop.xlane.xlu0 %727
    %v729 = vmul.f32 %v728, %v248
    %v730 = vsub.f32 %v722, %v729
    %v731 = vmul.f32 %v730, %v730
    %732 = vadd.xlane.f32.xlu0 %v731
    %v733 = vpop.xlane.xlu0 %732
    %v734 = vmul.f32 %v733, %v248
    %v735 = vadd.f32 %v734, 1e-05
    %v736 = vrsqrt.pop %v735
    %v737 = vmul.f32 %v736, %v735
    %v738 = vmul.f32 %v737, %v736
    %v739 = vmul.f32 0.5, %v738
    %v740 = vsub.f32 1.5, %v739
    %v741 = vmul.f32 %v736, %v740
    %vm742 = vweird.f32 %v735
    %vm743 = vweird.f32 %v736
    %vm744 = vmor %vm742, %vm743
    %v745 = vsel %vm744, %v736, %v741
    %v746 = vmul.f32 %v730, %v745
    %v748 = vperm.slane %v724, 0
    %v750 = vmul.f32 %v746, %v748
    %v752 = vperm.slane %v726, 0
    %v754 = vadd.f32 %v750, %v752
    %s755 = scalar_lea.vmem [#allocation17], 8
    %756 = vst [vmem:[%s755] sm:$0xff] %v754
    %v757 = vpack.c.bf16 %v754, %v754
    %s758 = scalar_lea.vmem [#allocation13], 64
    %v759 = vld [vmem:[%s758] sm:$0xf]
    %v760 = vld [vmem:[%s758 + $0x4] sm:$0xf]
    %v761 = vld [vmem:[%s758 + $0x8] sm:$0xf]
    %v762 = vld [vmem:[%s758 + $0xc] sm:$0xf]
    %v763 = vld [vmem:[%s758 + $0x10] sm:$0xf]
    %v764 = vld [vmem:[%s758 + $0x14] sm:$0xf]
    %v765 = vld [vmem:[%s758 + $0x18] sm:$0xf]
    %v766 = vld [vmem:[%s758 + $0x1c] sm:$0xf]
    %v767 = vld [vmem:[%s758 + $0x20] sm:$0xf]
    %v768 = vld [vmem:[%s758 + $0x24] sm:$0xf]
    %v769 = vld [vmem:[%s758 + $0x28] sm:$0xf]
    %v770 = vld [vmem:[%s758 + $0x2c] sm:$0xf]
    %v771 = vld [vmem:[%s758 + $0x30] sm:$0xf]
    %v772 = vld [vmem:[%s758 + $0x34] sm:$0xf]
    %v773 = vld [vmem:[%s758 + $0x38] sm:$0xf]
    %v774 = vld [vmem:[%s758 + $0x3c] sm:$0xf]
    %v791 = vunpack.c.l.b16 %v759
    %v792 = vunpack.c.l.b16 %v760
    %v793 = vunpack.c.l.b16 %v761
    %v794 = vunpack.c.l.b16 %v762
    %v795 = vunpack.c.l.b16 %v763
    %v796 = vunpack.c.l.b16 %v764
    %v797 = vunpack.c.l.b16 %v765
    %v798 = vunpack.c.l.b16 %v766
    %v799 = vunpack.c.l.b16 %v767
    %v800 = vunpack.c.l.b16 %v768
    %v801 = vunpack.c.l.b16 %v769
    %v802 = vunpack.c.l.b16 %v770
    %v803 = vunpack.c.l.b16 %v771
    %v804 = vunpack.c.l.b16 %v772
    %v805 = vunpack.c.l.b16 %v773
    %v806 = vunpack.c.l.b16 %v774
    %v807 = vpack.c.b16 %v792, %v791
    %v808 = vpack.c.b16 %v794, %v793
    %v809 = vpack.c.b16 %v796, %v795
    %v810 = vpack.c.b16 %v798, %v797
    %v811 = vpack.c.b16 %v800, %v799
    %v812 = vpack.c.b16 %v802, %v801
    %v813 = vpack.c.b16 %v804, %v803
    %v814 = vpack.c.b16 %v806, %v805
    %823 = vmatpush.bf16.msra.mxu0 %v814
    %824 = vmatpush.bf16.msra.mxu0 %v813
    %825 = vmatpush.bf16.msra.mxu0 %v812
    %826 = vmatpush.bf16.msra.mxu0 %v811
    %827 = vmatpush.bf16.msra.mxu0 %v810
    %828 = vmatpush.bf16.msra.mxu0 %v809
    %829 = vmatpush.bf16.msra.mxu0 %v808
    %830 = vmatpush.bf16.msra.mxu0 %v807
    %831 = vmatmul.bf16.gmra.mxu0 %v757
    %v832 = vpop.f32.mrf.mxu0
    %v833 = vadd.f32 0.0, %v832
    %v834 = vpop.f32.mrf.mxu0
    %835 = vdwg.mxu0
    %836 = vadd.xlane.f32.xlu0 %v833
    %v837 = vpop.xlane.xlu0 %836
    %v838 = vmul.f32 %v837, %v248
    %v839 = vsub.f32 %v833, %v838
    %v840 = vmul.f32 %v839, %v839
    %841 = vadd.xlane.f32.xlu0 %v840
    %v842 = vpop.xlane.xlu0 %841
    %v843 = vmul.f32 %v842, %v248
    %v844 = vadd.f32 %v843, 1e-05
    %v845 = vrsqrt.pop %v844
    %v846 = vmul.f32 %v845, %v844
    %v847 = vmul.f32 %v846, %v845
    %v848 = vmul.f32 0.5, %v847
    %v849 = vsub.f32 1.5, %v848
    %v850 = vmul.f32 %v845, %v849
    %vm851 = vweird.f32 %v844
    %vm852 = vweird.f32 %v845
    %vm853 = vmor %vm851, %vm852
    %v854 = vsel %vm853, %v845, %v850
    %v855 = vmul.f32 %v839, %v854
    %s856 = scalar_lea.vmem [#allocation5], 16
    %v857 = vld [vmem:[%s856] sm:$0xff]
    %v858 = vpack.c.bf16 %v855, %v855
    %v859 = vpack.c.bf16 %v857, %v857
    %s860 = scalar_lea.vmem [#allocation8], 256
    %v861 = vld [vmem:[%s860] sm:$0xf]
    %v862 = vld [vmem:[%s860 + $0x4] sm:$0xf]
    %v863 = vld [vmem:[%s860 + $0x8] sm:$0xf]
    %v864 = vld [vmem:[%s860 + $0xc] sm:$0xf]
    %v865 = vld [vmem:[%s860 + $0x10] sm:$0xf]
    %v866 = vld [vmem:[%s860 + $0x14] sm:$0xf]
    %v867 = vld [vmem:[%s860 + $0x18] sm:$0xf]
    %v868 = vld [vmem:[%s860 + $0x1c] sm:$0xf]
    %v869 = vld [vmem:[%s860 + $0x20] sm:$0xf]
    %v870 = vld [vmem:[%s860 + $0x24] sm:$0xf]
    %v871 = vld [vmem:[%s860 + $0x28] sm:$0xf]
    %v872 = vld [vmem:[%s860 + $0x2c] sm:$0xf]
    %v873 = vld [vmem:[%s860 + $0x30] sm:$0xf]
    %v874 = vld [vmem:[%s860 + $0x34] sm:$0xf]
    %v875 = vld [vmem:[%s860 + $0x38] sm:$0xf]
    %v876 = vld [vmem:[%s860 + $0x3c] sm:$0xf]
    %v877 = vld [vmem:[%s860 + $0x40] sm:$0xf]
    %v878 = vld [vmem:[%s860 + $0x44] sm:$0xf]
    %v879 = vld [vmem:[%s860 + $0x48] sm:$0xf]
    %v880 = vld [vmem:[%s860 + $0x4c] sm:$0xf]
    %v881 = vld [vmem:[%s860 + $0x50] sm:$0xf]
    %v882 = vld [vmem:[%s860 + $0x54] sm:$0xf]
    %v883 = vld [vmem:[%s860 + $0x58] sm:$0xf]
    %v884 = vld [vmem:[%s860 + $0x5c] sm:$0xf]
    %v885 = vld [vmem:[%s860 + $0x60] sm:$0xf]
    %v886 = vld [vmem:[%s860 + $0x64] sm:$0xf]
    %v887 = vld [vmem:[%s860 + $0x68] sm:$0xf]
    %v888 = vld [vmem:[%s860 + $0x6c] sm:$0xf]
    %v889 = vld [vmem:[%s860 + $0x70] sm:$0xf]
    %v890 = vld [vmem:[%s860 + $0x74] sm:$0xf]
    %v891 = vld [vmem:[%s860 + $0x78] sm:$0xf]
    %v892 = vld [vmem:[%s860 + $0x7c] sm:$0xf]
    %s893 = scalar_lea.vmem %s4, 2
    %v894 = vld [vmem:[%s893] sm:$0x1]
    %v896 = vperm.slane %v894, 0
    %v930 = vunpack.c.l.b16 %v861
    %v931 = vunpack.c.l.b16 %v862
    %v932 = vunpack.c.l.b16 %v863
    %v933 = vunpack.c.l.b16 %v864
    %v934 = vunpack.c.l.b16 %v865
    %v935 = vunpack.c.l.b16 %v866
    %v936 = vunpack.c.l.b16 %v867
    %v937 = vunpack.c.l.b16 %v868
    %v938 = vunpack.c.l.b16 %v869
    %v939 = vunpack.c.l.b16 %v870
    %v940 = vunpack.c.l.b16 %v871
    %v941 = vunpack.c.l.b16 %v872
    %v942 = vunpack.c.l.b16 %v873
    %v943 = vunpack.c.l.b16 %v874
    %v944 = vunpack.c.l.b16 %v875
    %v945 = vunpack.c.l.b16 %v876
    %v946 = vunpack.c.l.b16 %v877
    %v947 = vunpack.c.l.b16 %v878
    %v948 = vunpack.c.l.b16 %v879
    %v949 = vunpack.c.l.b16 %v880
    %v950 = vunpack.c.l.b16 %v881
    %v951 = vunpack.c.l.b16 %v882
    %v952 = vunpack.c.l.b16 %v883
    %v953 = vunpack.c.l.b16 %v884
    %v954 = vunpack.c.l.b16 %v885
    %v955 = vunpack.c.l.b16 %v886
    %v956 = vunpack.c.l.b16 %v887
    %v957 = vunpack.c.l.b16 %v888
    %v958 = vunpack.c.l.b16 %v889
    %v959 = vunpack.c.l.b16 %v890
    %v960 = vunpack.c.l.b16 %v891
    %v961 = vunpack.c.l.b16 %v892
    %v962 = vpack.c.b16 %v931, %v930
    %v963 = vpack.c.b16 %v933, %v932
    %v964 = vpack.c.b16 %v935, %v934
    %v965 = vpack.c.b16 %v937, %v936
    %v966 = vpack.c.b16 %v939, %v938
    %v967 = vpack.c.b16 %v941, %v940
    %v968 = vpack.c.b16 %v943, %v942
    %v969 = vpack.c.b16 %v945, %v944
    %v970 = vpack.c.b16 %v947, %v946
    %v971 = vpack.c.b16 %v949, %v948
    %v972 = vpack.c.b16 %v951, %v950
    %v973 = vpack.c.b16 %v953, %v952
    %v974 = vpack.c.b16 %v955, %v954
    %v975 = vpack.c.b16 %v957, %v956
    %v976 = vpack.c.b16 %v959, %v958
    %v977 = vpack.c.b16 %v961, %v960
    %994 = vmatpush.bf16.msra.mxu0 %v969
    %995 = vmatpush.bf16.msra.mxu0 %v968
    %996 = vmatpush.bf16.msra.mxu0 %v967
    %997 = vmatpush.bf16.msra.mxu0 %v966
    %998 = vmatpush.bf16.msra.mxu0 %v965
    %999 = vmatpush.bf16.msra.mxu0 %v964
    %1000 = vmatpush.bf16.msra.mxu0 %v963
    %1001 = vmatpush.bf16.msra.mxu0 %v962
    %1002 = vmatmul.bf16.gmra.mxu0 %v858
    %v1003 = vpop.f32.mrf.mxu0
    %v1004 = vadd.f32 %v896, %v1003
    %v1005 = vpop.f32.mrf.mxu0
    %1006 = vdwg.mxu0
    %1007 = vmatpush.bf16.msra.mxu0 %v977
    %1008 = vmatpush.bf16.msra.mxu0 %v976
    %1009 = vmatpush.bf16.msra.mxu0 %v975
    %1010 = vmatpush.bf16.msra.mxu0 %v974
    %1011 = vmatpush.bf16.msra.mxu0 %v973
    %1012 = vmatpush.bf16.msra.mxu0 %v972
    %1013 = vmatpush.bf16.msra.mxu0 %v971
    %1014 = vmatpush.bf16.msra.mxu0 %v970
    %1015 = vmatmul.bf16.gmra.mxu0 %v859
    %v1016 = vpop.f32.mrf.mxu0
    %v1017 = vadd.f32 %v1004, %v1016
    %v1018 = vpop.f32.mrf.mxu0
    %1019 = vdwg.mxu0
    %v1020 = vadd.f32 %v857, %v1017
    %s1021 = scalar_lea.vmem [#allocation10], 2
    %v1022 = vld [vmem:[%s1021] sm:$0x1]
    %s1023 = scalar_lea.vmem [#allocation11], 2
    %v1024 = vld [vmem:[%s1023] sm:$0x1]
    %1025 = vadd.xlane.f32.xlu0 %v1020
    %v1026 = vpop.xlane.xlu0 %1025
    %v1027 = vmul.f32 %v1026, %v248
    %v1028 = vsub.f32 %v1020, %v1027
    %v1029 = vmul.f32 %v1028, %v1028
    %1030 = vadd.xlane.f32.xlu0 %v1029
    %v1031 = vpop.xlane.xlu0 %1030
    %v1032 = vmul.f32 %v1031, %v248
    %v1033 = vadd.f32 %v1032, 1e-05
    %v1034 = vrsqrt.pop %v1033
    %v1035 = vmul.f32 %v1034, %v1033
    %v1036 = vmul.f32 %v1035, %v1034
    %v1037 = vmul.f32 0.5, %v1036
    %v1038 = vsub.f32 1.5, %v1037
    %v1039 = vmul.f32 %v1034, %v1038
    %vm1040 = vweird.f32 %v1033
    %vm1041 = vweird.f32 %v1034
    %vm1042 = vmor %vm1040, %vm1041
    %v1043 = vsel %vm1042, %v1034, %v1039
    %v1044 = vmul.f32 %v1028, %v1043
    %v1046 = vperm.slane %v1022, 0
    %v1048 = vmul.f32 %v1044, %v1046
    %v1050 = vperm.slane %v1024, 0
    %v1052 = vadd.f32 %v1048, %v1050
    %s1053 = scalar_lea.vmem [#allocation17], 16
    %1054 = vst [vmem:[%s1053] sm:$0xff] %v1052
    %v1055 = vpack.c.bf16 %v1052, %v1052
    %s1056 = scalar_lea.vmem [#allocation13], 128
    %v1057 = vld [vmem:[%s1056] sm:$0xf]
    %v1058 = vld [vmem:[%s1056 + $0x4] sm:$0xf]
    %v1059 = vld [vmem:[%s1056 + $0x8] sm:$0xf]
    %v1060 = vld [vmem:[%s1056 + $0xc] sm:$0xf]
    %v1061 = vld [vmem:[%s1056 + $0x10] sm:$0xf]
    %v1062 = vld [vmem:[%s1056 + $0x14] sm:$0xf]
    %v1063 = vld [vmem:[%s1056 + $0x18] sm:$0xf]
    %v1064 = vld [vmem:[%s1056 + $0x1c] sm:$0xf]
    %v1065 = vld [vmem:[%s1056 + $0x20] sm:$0xf]
    %v1066 = vld [vmem:[%s1056 + $0x24] sm:$0xf]
    %v1067 = vld [vmem:[%s1056 + $0x28] sm:$0xf]
    %v1068 = vld [vmem:[%s1056 + $0x2c] sm:$0xf]
    %v1069 = vld [vmem:[%s1056 + $0x30] sm:$0xf]
    %v1070 = vld [vmem:[%s1056 + $0x34] sm:$0xf]
    %v1071 = vld [vmem:[%s1056 + $0x38] sm:$0xf]
    %v1072 = vld [vmem:[%s1056 + $0x3c] sm:$0xf]
    %v1089 = vunpack.c.l.b16 %v1057
    %v1090 = vunpack.c.l.b16 %v1058
    %v1091 = vunpack.c.l.b16 %v1059
    %v1092 = vunpack.c.l.b16 %v1060
    %v1093 = vunpack.c.l.b16 %v1061
    %v1094 = vunpack.c.l.b16 %v1062
    %v1095 = vunpack.c.l.b16 %v1063
    %v1096 = vunpack.c.l.b16 %v1064
    %v1097 = vunpack.c.l.b16 %v1065
    %v1098 = vunpack.c.l.b16 %v1066
    %v1099 = vunpack.c.l.b16 %v1067
    %v1100 = vunpack.c.l.b16 %v1068
    %v1101 = vunpack.c.l.b16 %v1069
    %v1102 = vunpack.c.l.b16 %v1070
    %v1103 = vunpack.c.l.b16 %v1071
    %v1104 = vunpack.c.l.b16 %v1072
    %v1105 = vpack.c.b16 %v1090, %v1089
    %v1106 = vpack.c.b16 %v1092, %v1091
    %v1107 = vpack.c.b16 %v1094, %v1093
    %v1108 = vpack.c.b16 %v1096, %v1095
    %v1109 = vpack.c.b16 %v1098, %v1097
    %v1110 = vpack.c.b16 %v1100, %v1099
    %v1111 = vpack.c.b16 %v1102, %v1101
    %v1112 = vpack.c.b16 %v1104, %v1103
    %1121 = vmatpush.bf16.msra.mxu0 %v1112
    %1122 = vmatpush.bf16.msra.mxu0 %v1111
    %1123 = vmatpush.bf16.msra.mxu0 %v1110
    %1124 = vmatpush.bf16.msra.mxu0 %v1109
    %1125 = vmatpush.bf16.msra.mxu0 %v1108
    %1126 = vmatpush.bf16.msra.mxu0 %v1107
    %1127 = vmatpush.bf16.msra.mxu0 %v1106
    %1128 = vmatpush.bf16.msra.mxu0 %v1105
    %1129 = vmatmul.bf16.gmra.mxu0 %v1055
    %v1130 = vpop.f32.mrf.mxu0
    %v1131 = vadd.f32 0.0, %v1130
    %v1132 = vpop.f32.mrf.mxu0
    %1133 = vdwg.mxu0
    %1134 = vadd.xlane.f32.xlu0 %v1131
    %v1135 = vpop.xlane.xlu0 %1134
    %v1136 = vmul.f32 %v1135, %v248
    %v1137 = vsub.f32 %v1131, %v1136
    %v1138 = vmul.f32 %v1137, %v1137
    %1139 = vadd.xlane.f32.xlu0 %v1138
    %v1140 = vpop.xlane.xlu0 %1139
    %v1141 = vmul.f32 %v1140, %v248
    %v1142 = vadd.f32 %v1141, 1e-05
    %v1143 = vrsqrt.pop %v1142
    %v1144 = vmul.f32 %v1143, %v1142
    %v1145 = vmul.f32 %v1144, %v1143
    %v1146 = vmul.f32 0.5, %v1145
    %v1147 = vsub.f32 1.5, %v1146
    %v1148 = vmul.f32 %v1143, %v1147
    %vm1149 = vweird.f32 %v1142
    %vm1150 = vweird.f32 %v1143
    %vm1151 = vmor %vm1149, %vm1150
    %v1152 = vsel %vm1151, %v1143, %v1148
    %v1153 = vmul.f32 %v1137, %v1152
    %v1154 = vpack.c.bf16 %v1153, %v1153
    %v1155 = vld [vmem:[#allocation14] sm:$0xff]
    %v1156 = vld [vmem:[#allocation14 + $0x8] sm:$0xff]
    %v1157 = vld [vmem:[#allocation14 + $0x10] sm:$0xff]
    %v1158 = vld [vmem:[#allocation14 + $0x18] sm:$0xff]
    %v1159 = vld [vmem:[#allocation14 + $0x20] sm:$0xff]
    %v1160 = vld [vmem:[#allocation14 + $0x28] sm:$0xff]
    %v1161 = vld [vmem:[#allocation14 + $0x30] sm:$0xff]
    %v1162 = vld [vmem:[#allocation14 + $0x38] sm:$0xff]
    %v1163 = vld [vmem:[#allocation14 + $0x40] sm:$0xff]
    %v1164 = vld [vmem:[#allocation14 + $0x48] sm:$0xff]
    %v1165 = vld [vmem:[#allocation14 + $0x50] sm:$0xff]
    %v1166 = vld [vmem:[#allocation14 + $0x58] sm:$0xff]
    %v1167 = vld [vmem:[#allocation14 + $0x60] sm:$0xff]
    %v1168 = vld [vmem:[#allocation14 + $0x68] sm:$0xff]
    %v1169 = vld [vmem:[#allocation14 + $0x70] sm:$0xff]
    %v1170 = vld [vmem:[#allocation14 + $0x78] sm:$0xff]
    %v1171 = vld [vmem:[#allocation14 + $0x80] sm:$0xff]
    %v1172 = vld [vmem:[#allocation14 + $0x88] sm:$0xff]
    %v1173 = vld [vmem:[#allocation14 + $0x90] sm:$0xff]
    %v1174 = vld [vmem:[#allocation14 + $0x98] sm:$0xff]
    %v1175 = vld [vmem:[#allocation14 + $0xa0] sm:$0xff]
    %v1176 = vld [vmem:[#allocation14 + $0xa8] sm:$0xff]
    %v1177 = vld [vmem:[#allocation14 + $0xb0] sm:$0xff]
    %v1178 = vld [vmem:[#allocation14 + $0xb8] sm:$0xff]
    %v1179 = vld [vmem:[#allocation14 + $0xc0] sm:$0xff]
    %v1180 = vld [vmem:[#allocation14 + $0xc8] sm:$0xff]
    %v1181 = vld [vmem:[#allocation14 + $0xd0] sm:$0xff]
    %v1182 = vld [vmem:[#allocation14 + $0xd8] sm:$0xff]
    %v1183 = vld [vmem:[#allocation14 + $0xe0] sm:$0xff]
    %v1184 = vld [vmem:[#allocation14 + $0xe8] sm:$0xff]
    %v1185 = vld [vmem:[#allocation14 + $0xf0] sm:$0xff]
    %v1186 = vld [vmem:[#allocation14 + $0xf8] sm:$0xff]
    %v1187 = vld [vmem:[%s9] sm:$0xf]
    %v1189 = vperm.slane %v1187, 0
    %v1190 = vperm.slane %v1187, 1
    %v1191 = vperm.slane %v1187, 2
    %v1192 = vperm.slane %v1187, 3
    %v1229 = vunpack.c.l.b16 %v1155
    %v1230 = vunpack.c.h.b16 %v1155
    %v1231 = vunpack.c.l.b16 %v1156
    %v1232 = vunpack.c.h.b16 %v1156
    %v1233 = vunpack.c.l.b16 %v1157
    %v1234 = vunpack.c.h.b16 %v1157
    %v1235 = vunpack.c.l.b16 %v1158
    %v1236 = vunpack.c.h.b16 %v1158
    %v1237 = vunpack.c.l.b16 %v1159
    %v1238 = vunpack.c.h.b16 %v1159
    %v1239 = vunpack.c.l.b16 %v1160
    %v1240 = vunpack.c.h.b16 %v1160
    %v1241 = vunpack.c.l.b16 %v1161
    %v1242 = vunpack.c.h.b16 %v1161
    %v1243 = vunpack.c.l.b16 %v1162
    %v1244 = vunpack.c.h.b16 %v1162
    %v1245 = vunpack.c.l.b16 %v1163
    %v1246 = vunpack.c.h.b16 %v1163
    %v1247 = vunpack.c.l.b16 %v1164
    %v1248 = vunpack.c.h.b16 %v1164
    %v1249 = vunpack.c.l.b16 %v1165
    %v1250 = vunpack.c.h.b16 %v1165
    %v1251 = vunpack.c.l.b16 %v1166
    %v1252 = vunpack.c.h.b16 %v1166
    %v1253 = vunpack.c.l.b16 %v1167
    %v1254 = vunpack.c.h.b16 %v1167
    %v1255 = vunpack.c.l.b16 %v1168
    %v1256 = vunpack.c.h.b16 %v1168
    %v1257 = vunpack.c.l.b16 %v1169
    %v1258 = vunpack.c.h.b16 %v1169
    %v1259 = vunpack.c.l.b16 %v1170
    %v1260 = vunpack.c.h.b16 %v1170
    %v1261 = vunpack.c.l.b16 %v1171
    %v1262 = vunpack.c.h.b16 %v1171
    %v1263 = vunpack.c.l.b16 %v1172
    %v1264 = vunpack.c.h.b16 %v1172
    %v1265 = vunpack.c.l.b16 %v1173
    %v1266 = vunpack.c.h.b16 %v1173
    %v1267 = vunpack.c.l.b16 %v1174
    %v1268 = vunpack.c.h.b16 %v1174
    %v1269 = vunpack.c.l.b16 %v1175
    %v1270 = vunpack.c.h.b16 %v1175
    %v1271 = vunpack.c.l.b16 %v1176
    %v1272 = vunpack.c.h.b16 %v1176
    %v1273 = vunpack.c.l.b16 %v1177
    %v1274 = vunpack.c.h.b16 %v1177
    %v1275 = vunpack.c.l.b16 %v1178
    %v1276 = vunpack.c.h.b16 %v1178
    %v1277 = vunpack.c.l.b16 %v1179
    %v1278 = vunpack.c.h.b16 %v1179
    %v1279 = vunpack.c.l.b16 %v1180
    %v1280 = vunpack.c.h.b16 %v1180
    %v1281 = vunpack.c.l.b16 %v1181
    %v1282 = vunpack.c.h.b16 %v1181
    %v1283 = vunpack.c.l.b16 %v1182
    %v1284 = vunpack.c.h.b16 %v1182
    %v1285 = vunpack.c.l.b16 %v1183
    %v1286 = vunpack.c.h.b16 %v1183
    %v1287 = vunpack.c.l.b16 %v1184
    %v1288 = vunpack.c.h.b16 %v1184
    %v1289 = vunpack.c.l.b16 %v1185
    %v1290 = vunpack.c.h.b16 %v1185
    %v1291 = vunpack.c.l.b16 %v1186
    %v1292 = vunpack.c.h.b16 %v1186
    %v1293 = vpack.c.b16 %v1233, %v1229
    %v1294 = vpack.c.b16 %v1234, %v1230
    %v1295 = vpack.c.b16 %v1235, %v1231
    %v1296 = vpack.c.b16 %v1236, %v1232
    %v1297 = vpack.c.b16 %v1241, %v1237
    %v1298 = vpack.c.b16 %v1242, %v1238
    %v1299 = vpack.c.b16 %v1243, %v1239
    %v1300 = vpack.c.b16 %v1244, %v1240
    %v1301 = vpack.c.b16 %v1249, %v1245
    %v1302 = vpack.c.b16 %v1250, %v1246
    %v1303 = vpack.c.b16 %v1251, %v1247
    %v1304 = vpack.c.b16 %v1252, %v1248
    %v1305 = vpack.c.b16 %v1257, %v1253
    %v1306 = vpack.c.b16 %v1258, %v1254
    %v1307 = vpack.c.b16 %v1259, %v1255
    %v1308 = vpack.c.b16 %v1260, %v1256
    %v1309 = vpack.c.b16 %v1265, %v1261
    %v1310 = vpack.c.b16 %v1266, %v1262
    %v1311 = vpack.c.b16 %v1267, %v1263
    %v1312 = vpack.c.b16 %v1268, %v1264
    %v1313 = vpack.c.b16 %v1273, %v1269
    %v1314 = vpack.c.b16 %v1274, %v1270
    %v1315 = vpack.c.b16 %v1275, %v1271
    %v1316 = vpack.c.b16 %v1276, %v1272
    %v1317 = vpack.c.b16 %v1281, %v1277
    %v1318 = vpack.c.b16 %v1282, %v1278
    %v1319 = vpack.c.b16 %v1283, %v1279
    %v1320 = vpack.c.b16 %v1284, %v1280
    %v1321 = vpack.c.b16 %v1289, %v1285
    %v1322 = vpack.c.b16 %v1290, %v1286
    %v1323 = vpack.c.b16 %v1291, %v1287
    %v1324 = vpack.c.b16 %v1292, %v1288
    %1357 = vmatpush.bf16.msra.mxu0 %v1321
    %1358 = vmatpush.bf16.msra.mxu0 %v1317
    %1359 = vmatpush.bf16.msra.mxu0 %v1313
    %1360 = vmatpush.bf16.msra.mxu0 %v1309
    %1361 = vmatpush.bf16.msra.mxu0 %v1305
    %1362 = vmatpush.bf16.msra.mxu0 %v1301
    %1363 = vmatpush.bf16.msra.mxu0 %v1297
    %1364 = vmatpush.bf16.msra.mxu0 %v1293
    %1365 = vmatmul.bf16.gmra.mxu0 %v1154
    %v1366 = vpop.f32.mrf.mxu0
    %v1367 = vadd.f32 %v1189, %v1366
    %v1368 = vpop.f32.mrf.mxu0
    %1369 = vdwg.mxu0
    %1370 = vmatpush.bf16.msra.mxu0 %v1322
    %1371 = vmatpush.bf16.msra.mxu0 %v1318
    %1372 = vmatpush.bf16.msra.mxu0 %v1314
    %1373 = vmatpush.bf16.msra.mxu0 %v1310
    %1374 = vmatpush.bf16.msra.mxu0 %v1306
    %1375 = vmatpush.bf16.msra.mxu0 %v1302
    %1376 = vmatpush.bf16.msra.mxu0 %v1298
    %1377 = vmatpush.bf16.msra.mxu0 %v1294
    %1378 = vmatmul.bf16.gmra.mxu0 %v1154
    %v1379 = vpop.f32.mrf.mxu0
    %v1380 = vadd.f32 %v1190, %v1379
    %v1381 = vpop.f32.mrf.mxu0
    %1382 = vdwg.mxu0
    %1383 = vmatpush.bf16.msra.mxu0 %v1323
    %1384 = vmatpush.bf16.msra.mxu0 %v1319
    %1385 = vmatpush.bf16.msra.mxu0 %v1315
    %1386 = vmatpush.bf16.msra.mxu0 %v1311
    %1387 = vmatpush.bf16.msra.mxu0 %v1307
    %1388 = vmatpush.bf16.msra.mxu0 %v1303
    %1389 = vmatpush.bf16.msra.mxu0 %v1299
    %1390 = vmatpush.bf16.msra.mxu0 %v1295
    %1391 = vmatmul.bf16.gmra.mxu0 %v1154
    %v1392 = vpop.f32.mrf.mxu0
    %v1393 = vadd.f32 %v1191, %v1392
    %v1394 = vpop.f32.mrf.mxu0
    %1395 = vdwg.mxu0
    %1396 = vmatpush.bf16.msra.mxu0 %v1324
    %1397 = vmatpush.bf16.msra.mxu0 %v1320
    %1398 = vmatpush.bf16.msra.mxu0 %v1316
    %1399 = vmatpush.bf16.msra.mxu0 %v1312
    %1400 = vmatpush.bf16.msra.mxu0 %v1308
    %1401 = vmatpush.bf16.msra.mxu0 %v1304
    %1402 = vmatpush.bf16.msra.mxu0 %v1300
    %1403 = vmatpush.bf16.msra.mxu0 %v1296
    %1404 = vmatmul.bf16.gmra.mxu0 %v1154
    %v1405 = vpop.f32.mrf.mxu0
    %v1406 = vadd.f32 %v1192, %v1405
    %v1407 = vpop.f32.mrf.mxu0
    %1408 = vdwg.mxu0
    %v1409 = vmax.f32 %v1367, %v1380
    %v1410 = vmax.f32 %v1393, %v1406
    %v1411 = vmax.f32 %v1409, %v1410
    %1412 = vmax.xlane.f32.xlu0 %v1411
    %v1413 = vpop.xlane.xlu0 %1412
    %v1414 = vsub.f32 %v1367, %v1413
    %v1415 = vsub.f32 %v1380, %v1413
    %v1416 = vsub.f32 %v1393, %v1413
    %v1417 = vsub.f32 %v1406, %v1413
    %v1418 = vmul.f32 %v1414, 1.442695
    %v1419 = vpow.pop %v1418
    %v1420 = vmul.f32 %v1415, 1.442695
    %v1421 = vpow.pop %v1420
    %v1422 = vmul.f32 %v1416, 1.442695
    %v1423 = vpow.pop %v1422
    %v1424 = vmul.f32 %v1417, 1.442695
    %v1425 = vpow.pop %v1424
    %v1426 = vadd.f32 %v1419, %v1421
    %v1427 = vadd.f32 %v1426, %v1423
    %v1428 = vadd.f32 %v1427, %v1425
    %1429 = vadd.xlane.f32.xlu0 %v1428
    %v1430 = vpop.xlane.xlu0 %1429
    %v1431 = vrcp.pop %v1430
    %v1432 = vmul.f32 %v1419, %v1431
    %v1433 = vmul.f32 %v1421, %v1431
    %v1434 = vmul.f32 %v1423, %v1431
    %v1435 = vmul.f32 %v1425, %v1431
    %1436 = vst [vmem:[#allocation16] sm:$0xff] %v1432
    %1437 = vst [vmem:[#allocation16 + $0x8] sm:$0xff] %v1433
    %1438 = vst [vmem:[#allocation16 + $0x10] sm:$0xff] %v1434
    %1439 = vst [vmem:[#allocation16 + $0x18] sm:$0xff] %v1435
    // Predicated region
    $region74: #{tpu_custom_call.1} parent=1 // pred_check
      _
    $region75: #{tpu_custom_call.1} parent=1 // pred_check_branch
      %1441 = sbr.rel (0) target = $region77
    $region76: #{tpu_custom_call.1} parent=1 // pred_region
      %1443 = vsyncadd [#allocation4], 0
      %s1445 = sshll.u32 [#allocation16], 4
      %s1446 = int_to_ptr.vmem [resolvable:$true] %s1445
      %s1447 = sshll.u32 %s10, 4
      %s1448 = int_to_ptr.hbm [resolvable:$true] %s1447
      %1450 = dma.vmem_to_hbm [thread:$0]  %s1446, 512, %s1448, [#allocation4]
    $region77: #{tpu_custom_call.1} parent=1 // pred_fallthru
      _
    // Predicated region
    $region78: #{tpu_custom_call.1} parent=1 // pred_check
      _
    $region79: #{tpu_custom_call.1} parent=1 // pred_check_branch
      %1452 = sbr.rel (0) target = $region81
    $region80: #{tpu_custom_call.1} parent=1 // pred_region
      %1454 = vsyncadd [#allocation18], 0
      %s1455 = sshll.u32 [#allocation17], 4
      %s1456 = int_to_ptr.vmem [resolvable:$true] %s1455
      %s1457 = sshll.u32 %s11, 4
      %s1458 = int_to_ptr.hbm [resolvable:$true] %s1457
      %1463 = dma.vmem_to_hbm [thread:$0]  %s1456, 384, %s1458, [#allocation18], 128, 128, 8
    $region81: #{tpu_custom_call.1} parent=1 // pred_fallthru
      _
    // Predicated region
    $region82: #{tpu_custom_call.1} parent=1 // pred_check
      _
    $region83: #{tpu_custom_call.1} parent=1 // pred_check_branch
      %1465 = sbr.rel (0) target = $region85
    $region84: #{tpu_custom_call.1} parent=1 // pred_region
      %1467 = dma.done [#allocation4], 512
    $region85: #{tpu_custom_call.1} parent=1 // pred_fallthru
      _
    // Predicated region
    $region86: #{tpu_custom_call.1} parent=1 // pred_check
      _
    $region87: #{tpu_custom_call.1} parent=1 // pred_check_branch
      %1469 = sbr.rel (0) target = $region89
    $region88: #{tpu_custom_call.1} parent=1 // pred_region
      %1471 = dma.done [#allocation18], 384
    $region89: #{tpu_custom_call.1} parent=1 // pred_fallthru
      _
    %1472 = vsyncpa [#allocation3], 1
    %1473 = vsyncpa [#allocation6], 1
    %1474 = vsyncpa [#allocation9], 1
    %1475 = vsyncpa [#allocation12], 1
    %1476 = vsyncpa [#allocation15], 1
    %1477 = vsyncpa [#allocation4], 1
    %1478 = vsyncpa [#allocation18], 1

</llo_original>
